<compile_context>
chip_gen: v7x
topology: tpu7x:2x2x1
jax: 0.10.0
libtpu: 0.0.40
codegen_flags: <defaults>
</compile_context>

<pallas_src>
import functools
import numpy as np

import jax
import jax.numpy as jnp
from jax.experimental import pallas as pl
from jax.experimental.pallas import tpu as pltpu


def _round_up(a, b):
    return (a + b - 1) // b * b


TK_CAP = 4608  # largest K tile (bf16: 4608*256*2*2buf ~ 4.7 MB, fits all gens)


def _pick_tk(Kp, cap=TK_CAP):
    """Largest multiple of 128 <= cap that divides Kp (Kp is a multiple of 128)."""
    tk = min(cap, Kp)
    tk -= tk % 128
    while Kp % tk:
        tk -= 128
    return tk


# ----------------------------------------------------------------------------
# Pallas kernels
# ----------------------------------------------------------------------------

def _mm_kernel(x_ref, w_ref, b_ref, *rest, relu, has_res):
    """Batched tiled matmul: bf16 operands, f32 accumulation directly in o_ref,
    fused bias (+ optional residual) (+ optional ReLU) epilogue on last K step."""
    if has_res:
        r_ref, o_ref = rest
    else:
        (o_ref,) = rest
        r_ref = None
    k = pl.program_id(3)

    @pl.when(k == 0)
    def _():
        o_ref[...] = jnp.zeros_like(o_ref)

    o_ref[0] += jnp.dot(x_ref[0], w_ref[0], preferred_element_type=jnp.float32)

    @pl.when(k == pl.num_programs(3) - 1)
    def _():
        y = o_ref[0] + b_ref[0]
        if has_res:
            y = y + r_ref[0]
        if relu:
            y = jnp.maximum(y, 0.0)
        o_ref[0] = y


def matmul_bias_act(x, w, bias, *, relu=False, residual=None):
    """Batched (B,M,K) @ (B,K,N) + bias[B,N] (+ residual[B,M,N]) (+ ReLU) -> f32.

    x is cast to bf16; w is expected bf16 (BN scale pre-folded); bias f32.
    """
    B, M, K = x.shape
    _, K2, N = w.shape
    assert K == K2
    tm = min(256, _round_up(M, 8))
    Mp = _round_up(M, tm)
    Np = _round_up(N, 128)
    tn = 256 if (Np % 256 == 0) else 128
    Kp = _round_up(K, 128)
    tk = _pick_tk(Kp)

    xp = jnp.pad(x.astype(jnp.bfloat16), ((0, 0), (0, Mp - M), (0, Kp - K)))
    wp = w.astype(jnp.bfloat16)
    if (Kp, Np) != (K, N):
        wp = jnp.pad(wp, ((0, 0), (0, Kp - K), (0, Np - N)))
    bp = jnp.pad(bias.astype(jnp.float32).reshape(B, 1, N),
                 ((0, 0), (0, 0), (0, Np - N)))

    in_specs = [pl.BlockSpec((1, tm, tk), lambda b, i, j, k: (b, i, k)),
                pl.BlockSpec((1, tk, tn), lambda b, i, j, k: (b, k, j)),
                pl.BlockSpec((1, 1, tn), lambda b, i, j, k: (b, 0, j))]
    args = [xp, wp, bp]
    has_res = residual is not None
    if has_res:
        rp = jnp.pad(residual.astype(jnp.float32),
                     ((0, 0), (0, Mp - M), (0, Np - N)))
        in_specs.append(pl.BlockSpec((1, tm, tn), lambda b, i, j, k: (b, i, j)))
        args.append(rp)

    out = pl.pallas_call(
        functools.partial(_mm_kernel, relu=relu, has_res=has_res),
        out_shape=jax.ShapeDtypeStruct((B, Mp, Np), jnp.float32),
        grid_spec=pltpu.PrefetchScalarGridSpec(
            num_scalar_prefetch=0,
            grid=(B, Mp // tm, Np // tn, Kp // tk),
            in_specs=in_specs,
            out_specs=pl.BlockSpec((1, tm, tn), lambda b, i, j, k: (b, i, j))),
        compiler_params=pltpu.CompilerParams(
            dimension_semantics=("parallel", "parallel", "parallel", "arbitrary"),
            vmem_limit_bytes=32 * 1024 * 1024),
    )(*args)
    return out[:, :M, :N]


def matmul2d(x, w, bias, *, relu=False, residual=None):
    res = None if residual is None else residual[None]
    return matmul_bias_act(x[None], w[None], bias[None],
                           relu=relu, residual=res)[0]


def _max_over_rows_kernel(x_ref, o_ref):
    o_ref[...] = jnp.max(x_ref[...], axis=0, keepdims=True)


def max_over_rows(x):   # x: (R, L) -> (1, L), column-blocked (resolution-safe)
    R, L = x.shape
    tc = min(4096, _round_up(L, 128))
    Lp = _round_up(L, tc)
    neg = float(np.finfo(np.float32).min)
    xp = jnp.pad(x, ((0, 0), (0, Lp - L)), constant_values=neg)
    out = pl.pallas_call(
        _max_over_rows_kernel,
        out_shape=jax.ShapeDtypeStruct((1, Lp), jnp.float32),
        grid_spec=pltpu.PrefetchScalarGridSpec(
            num_scalar_prefetch=0, grid=(Lp // tc,),
            in_specs=[pl.BlockSpec((R, tc), lambda j: (0, j))],
            out_specs=pl.BlockSpec((1, tc), lambda j: (0, j))),
        compiler_params=pltpu.CompilerParams(
            dimension_semantics=("parallel",)),
    )(xp)
    return out[:, :L]


def _mean_over_rows_kernel(x_ref, o_ref):
    o_ref[...] = jnp.mean(x_ref[...], axis=0, keepdims=True)


def mean_over_rows(x):  # x: (R, L) -> (1, L), column-blocked (resolution-safe)
    R, L = x.shape
    tc = min(4096, _round_up(L, 128))
    Lp = _round_up(L, tc)
    xp = jnp.pad(x, ((0, 0), (0, Lp - L)))
    out = pl.pallas_call(
        _mean_over_rows_kernel,
        out_shape=jax.ShapeDtypeStruct((1, Lp), jnp.float32),
        grid_spec=pltpu.PrefetchScalarGridSpec(
            num_scalar_prefetch=0, grid=(Lp // tc,),
            in_specs=[pl.BlockSpec((R, tc), lambda j: (0, j))],
            out_specs=pl.BlockSpec((1, tc), lambda j: (0, j))),
        compiler_params=pltpu.CompilerParams(
            dimension_semantics=("parallel",)),
    )(xp)
    return out[:, :L]


# ----------------------------------------------------------------------------
# Conv / pooling wrappers (im2col glue in JAX, compute in Pallas)
# ----------------------------------------------------------------------------

def _extract_patches(x, kh, kw, stride, dilation, padding):
    """x: NHWC -> patches (N, OH, OW, kh*kw*C), feature order (kh, kw, c)."""
    N, H, W, C = x.shape
    if padding:
        x = jnp.pad(x, ((0, 0), (padding, padding), (padding, padding), (0, 0)))
    Hp, Wp = H + 2 * padding, W + 2 * padding
    OH = (Hp - (dilation * (kh - 1) + 1)) // stride + 1
    OW = (Wp - (dilation * (kw - 1) + 1)) // stride + 1
    cols = []
    for i in range(kh):
        for j in range(kw):
            sl = jax.lax.slice(
                x,
                (0, i * dilation, j * dilation, 0),
                (N, i * dilation + stride * (OH - 1) + 1,
                 j * dilation + stride * (OW - 1) + 1, C),
                (1, stride, stride, 1))
            cols.append(sl)
    return jnp.concatenate(cols, axis=-1), OH, OW


def conv_bn_act(x, fw, *, kh=1, kw=1, stride=1, dilation=1, padding=0,
                relu=True, residual=None):
    """x: NHWC f32; fw: {"w": (kh*kw*cin, cout) bf16 BN-folded, "b": (cout,) f32}.

    Optional `residual` (NHWC, same shape as output) is fused into the epilogue
    as add+ReLU (bottleneck residual connection)."""
    N, H, W, C = x.shape
    if kh == 1 and kw == 1 and padding == 0:
        if stride > 1:
            x = x[:, ::stride, ::stride, :]
        _, OH, OW, _ = x.shape
        patches = x.reshape(N * OH * OW, C)
    else:
        p, OH, OW = _extract_patches(x, kh, kw, stride, dilation, padding)
        patches = p.reshape(N * OH * OW, kh * kw * C)
    cout = fw["w"].shape[1]
    res2d = None if residual is None else residual.reshape(N * OH * OW, cout)
    y = matmul2d(patches, fw["w"], fw["b"], relu=relu, residual=res2d)
    return y.reshape(N, OH, OW, cout)


def maxpool_3x3_s2_p1(x):
    """PyTorch MaxPool2d(kernel_size=3, stride=2, padding=1) on NHWC."""
    N, H, W, C = x.shape
    neg = float(np.finfo(np.float32).min)
    xp = jnp.pad(x, ((0, 0), (1, 1), (1, 1), (0, 0)), constant_values=neg)
    OH = (H + 2 - 3) // 2 + 1
    OW = (W + 2 - 3) // 2 + 1
    slices = []
    for i in range(3):
        for j in range(3):
            sl = jax.lax.slice(xp, (0, i, j, 0),
                               (N, i + 2 * (OH - 1) + 1, j + 2 * (OW - 1) + 1, C),
                               (1, 2, 2, 1))
            slices.append(sl.reshape(N * OH * OW * C))
    stacked = jnp.stack(slices, axis=0)          # (9, N*OH*OW*C)
    out = max_over_rows(stacked)                 # reduction in Pallas
    return out.reshape(N, OH, OW, C)


def global_avg_pool(x):
    """AdaptiveAvgPool2d(1) on NHWC -> (N, 1, 1, C)."""
    N, H, W, C = x.shape
    flat = jnp.transpose(x.reshape(N, H * W, C), (1, 0, 2)).reshape(H * W, N * C)
    m = mean_over_rows(flat)                     # reduction in Pallas
    return m.reshape(1, N, C).transpose(1, 0, 2).reshape(N, 1, 1, C)


def _bilinear_matrix(in_size, out_size):
    """Interp matrix matching F.interpolate(mode='bilinear', align_corners=False)."""
    dst = np.arange(out_size, dtype=np.float64)
    src = np.clip((dst + 0.5) * (in_size / out_size) - 0.5, 0.0, in_size - 1)
    i0 = np.floor(src).astype(np.int64)
    i1 = np.minimum(i0 + 1, in_size - 1)
    w1 = src - i0
    w0 = 1.0 - w1
    m = np.zeros((out_size, in_size), dtype=np.float32)
    np.add.at(m, (np.arange(out_size), i0), w0)
    np.add.at(m, (np.arange(out_size), i1), w1)
    return m


@functools.partial(jax.jit, static_argnames=("out_h", "out_w"))
def bilinear_resize_nchw(x, *, out_h, out_w):
    """Separable bilinear upsample (align_corners=False) via two Pallas matmuls."""
    N, C, H, W = x.shape
    ww = jnp.asarray(_bilinear_matrix(W, out_w)).T.astype(jnp.bfloat16)  # (W, out_w)
    wh = jnp.asarray(_bilinear_matrix(H, out_h)).T.astype(jnp.bfloat16)  # (H, out_h)
    zw = jnp.zeros((out_w,), jnp.float32)
    zh = jnp.zeros((out_h,), jnp.float32)
    t = matmul2d(x.reshape(N * C * H, W), ww, zw, relu=False)
    t = t.reshape(N, C, H, out_w).transpose(0, 1, 3, 2).reshape(N * C * out_w, H)
    t = matmul2d(t, wh, zh, relu=False)
    return t.reshape(N, C, out_w, out_h).transpose(0, 1, 3, 2)


# ----------------------------------------------------------------------------
# Network blocks
# ----------------------------------------------------------------------------

@jax.jit
def stem_forward(x, conv1):
    x = conv_bn_act(x, conv1, kh=7, kw=7, stride=2, padding=3, relu=True)
    return maxpool_3x3_s2_p1(x)


@functools.partial(jax.jit, static_argnames=("stride", "dilation", "has_ds"))
def bottleneck_forward(x, p, *, stride, dilation, has_ds):
    identity = x
    out = conv_bn_act(x, p["conv1"], relu=True)
    out = conv_bn_act(out, p["conv2"], kh=3, kw=3, stride=stride,
                      dilation=dilation, padding=dilation, relu=True)
    if has_ds:
        identity = conv_bn_act(x, p["ds"], stride=stride, relu=False)
    # residual add + ReLU fused into the conv3 matmul epilogue
    return conv_bn_act(out, p["conv3"], relu=True, residual=identity)


ATROUS_RATES = (12, 24, 36)


@functools.partial(jax.jit, static_argnames=("num_class",))
def deeplab_head_forward(x, hp, *, num_class):
    N, H, W, C = x.shape
    branches = [conv_bn_act(x, hp["aspp0"], relu=True)]

    # The three dilated 3x3 ASPP branches share (M, K) => batch them into one
    # pallas_call with a leading "parallel" branch axis (megacore-friendly).
    pats = []
    for rate in ATROUS_RATES:
        p, _, _ = _extract_patches(x, 3, 3, 1, rate, rate)
        pats.append(p.reshape(N * H * W, 9 * C))
    xb = jnp.stack(pats, axis=0)                              # (3, M, 9C)
    yb = matmul_bias_act(xb, hp["aspp_dil_w"], hp["aspp_dil_b"], relu=True)
    for i in range(len(ATROUS_RATES)):
        branches.append(yb[i].reshape(N, H, W, -1))

    # ASPP pooling branch: global avg pool -> 1x1 conv/BN/ReLU -> upsample
    g = global_avg_pool(x)
    g = conv_bn_act(g, hp["aspp_pool"], relu=True)
    branches.append(jnp.broadcast_to(g, (N, H, W, g.shape[-1])))  # bilinear from 1x1 == broadcast

    cat = jnp.concatenate(branches, axis=-1)
    x = conv_bn_act(cat, hp["aspp_proj"], relu=True)
    # TODO(synk): nn.Dropout(0.5) is identity in eval mode; training-mode dropout not implemented.
    x = conv_bn_act(x, hp["head_conv"], kh=3, kw=3, padding=1, relu=True)
    x = conv_bn_act(x, hp["cls"], relu=False)
    return x


def deeplab3_forward(x_nchw, params, num_class=7):
    N, _, H_in, W_in = x_nchw.shape
    x = jnp.transpose(x_nchw.astype(jnp.float32), (0, 2, 3, 1))   # NCHW -> NHWC
    x = stem_forward(x, params["conv1"])
    for blocks in params["layers"]:
        for p, cfg in blocks:
            x = bottleneck_forward(x, p, stride=cfg["stride"],
                                   dilation=cfg["dilation"], has_ds=cfg["has_ds"])
    x = deeplab_head_forward(x, params["head"], num_class=num_class)
    x = jnp.transpose(x, (0, 3, 1, 2))                            # NHWC -> NCHW
    return bilinear_resize_nchw(x, out_h=H_in, out_w=W_in)


# ----------------------------------------------------------------------------
# Deterministic synthetic parameters (same shapes as deeplabv3_resnet101)
# ----------------------------------------------------------------------------

class ParamGen:
    def __init__(self, seed):
        self._key = jax.random.PRNGKey(seed)

    def _next(self):
        self._key, sub = jax.random.split(self._key)
        return sub

    def conv(self, cout, cin, kh, kw):
        fan_in = cin * kh * kw
        return (jax.random.normal(self._next(), (cout, cin, kh, kw), jnp.float32)
                / np.sqrt(fan_in))

    def bias(self, c):
        return 0.1 * jax.random.normal(self._next(), (c,), jnp.float32)

    def bn(self, c):
        gamma = 1.0 + 0.1 * jax.random.normal(self._next(), (c,), jnp.float32)
        beta = 0.1 * jax.random.normal(self._next(), (c,), jnp.float32)
        mean = 0.1 * jax.random.normal(self._next(), (c,), jnp.float32)
        var = 1.0 + 0.1 * jax.random.uniform(self._next(), (c,), jnp.float32)
        scale = gamma / jnp.sqrt(var + 1e-5)
        shift = beta - mean * scale
        return scale, shift   # eval-mode BN folded to affine


def build_params(num_class=7, seed=0):
    g = ParamGen(seed)
    params = {"conv1_w": g.conv(64, 3, 7, 7), "bn1": g.bn(64)}

    # ResNet-101: layers = [3, 4, 23, 3]; replace_stride_with_dilation=[False, True, True]
    layer_defs = [(64, 3, 1, False), (128, 4, 2, False),
                  (256, 23, 2, True), (512, 3, 2, True)]
    inplanes, dilation = 64, 1
    layers = []
    for planes, blocks, stride, dilate in layer_defs:
        prev_dilation = dilation
        if dilate:
            dilation *= stride
            stride = 1
        blks = []
        for b in range(blocks):
            if b == 0:
                has_ds = (stride != 1) or (inplanes != planes * 4)
                blk_stride, blk_dil = stride, prev_dilation
            else:
                has_ds = False
                blk_stride, blk_dil = 1, dilation
            p = {"conv1_w": g.conv(planes, inplanes, 1, 1), "bn1": g.bn(planes),
                 "conv2_w": g.conv(planes, planes, 3, 3), "bn2": g.bn(planes),
                 "conv3_w": g.conv(planes * 4, planes, 1, 1), "bn3": g.bn(planes * 4)}
            if has_ds:
                p["ds_w"] = g.conv(planes * 4, inplanes, 1, 1)
                p["ds_bn"] = g.bn(planes * 4)
            cfg = {"stride": blk_stride, "dilation": blk_dil, "has_ds": has_ds}
            blks.append((p, cfg))
            inplanes = planes * 4
        layers.append(blks)
    params["layers"] = layers

    head = {"aspp0_w": g.conv(256, 2048, 1, 1), "aspp0_bn": g.bn(256)}
    for i in range(len(ATROUS_RATES)):
        head[f"aspp{i + 1}_w"] = g.conv(256, 2048, 3, 3)
        head[f"aspp{i + 1}_bn"] = g.bn(256)
    head["aspp_pool_w"] = g.conv(256, 2048, 1, 1)
    head["aspp_pool_bn"] = g.bn(256)
    head["aspp_proj_w"] = g.conv(256, 5 * 256, 1, 1)
    head["aspp_proj_bn"] = g.bn(256)
    head["head_conv_w"] = g.conv(256, 256, 3, 3)
    head["head_bn"] = g.bn(256)
    head["cls_w"] = g.conv(num_class, 256, 1, 1)
    head["cls_b"] = g.bias(num_class)
    params["head"] = head
    return params


# ----------------------------------------------------------------------------
# One-time weight pre-layout: transpose to (K, N), fold BN scale, cast bf16.
# ----------------------------------------------------------------------------

def _fold(w, bn):
    scale, shift = bn
    cout, cin, kh, kw = w.shape
    wm = jnp.transpose(w, (2, 3, 1, 0)).reshape(kh * kw * cin, cout)
    return {"w": (wm * scale[None, :]).astype(jnp.bfloat16),
            "b": shift.astype(jnp.float32)}


def _plain(w, b):
    cout, cin, kh, kw = w.shape
    wm = jnp.transpose(w, (2, 3, 1, 0)).reshape(kh * kw * cin, cout)
    return {"w": wm.astype(jnp.bfloat16), "b": b.astype(jnp.float32)}


def prepare_params(raw):
    prm = {"conv1": _fold(raw["conv1_w"], raw["bn1"])}
    layers = []
    for blocks in raw["layers"]:
        blks = []
        for p, cfg in blocks:
            q = {"conv1": _fold(p["conv1_w"], p["bn1"]),
                 "conv2": _fold(p["conv2_w"], p["bn2"]),
                 "conv3": _fold(p["conv3_w"], p["bn3"])}
            if cfg["has_ds"]:
                q["ds"] = _fold(p["ds_w"], p["ds_bn"])
            blks.append((q, cfg))
        layers.append(blks)
    prm["layers"] = layers

    h = raw["head"]
    head = {"aspp0": _fold(h["aspp0_w"], h["aspp0_bn"])}
    dil_w, dil_b = [], []
    for i in range(len(ATROUS_RATES)):
        f = _fold(h[f"aspp{i + 1}_w"], h[f"aspp{i + 1}_bn"])
        dil_w.append(f["w"])
        dil_b.append(f["b"])
    head["aspp_dil_w"] = jnp.stack(dil_w, axis=0)   # (3, 9*2048, 256) bf16
    head["aspp_dil_b"] = jnp.stack(dil_b, axis=0)   # (3, 256) f32
    head["aspp_pool"] = _fold(h["aspp_pool_w"], h["aspp_pool_bn"])
    head["aspp_proj"] = _fold(h["aspp_proj_w"], h["aspp_proj_bn"])
    head["head_conv"] = _fold(h["head_conv_w"], h["head_bn"])
    head["cls"] = _plain(h["cls_w"], h["cls_b"])    # conv with real bias, no BN
    prm["head"] = head
    return prm


# ----------------------------------------------------------------------------

if __name__ == "__main__":
    num_class = 7
    raw_params = build_params(num_class=num_class, seed=0)
    params = prepare_params(raw_params)

    key = jax.random.PRNGKey(0)
    x = jax.random.normal(key, (2, 3, 32, 32), jnp.float32)   # NCHW, like PyTorch

    out = deeplab3_forward(x, params, num_class=num_class)
    out = jax.block_until_ready(out)

    assert out.shape == (2, num_class, 32, 32), out.shape
    assert out.dtype == jnp.float32
    assert bool(jnp.all(jnp.isfinite(out)))
    print("KERNEL_OK")
</pallas_src>

<mosaic_0001>
module attributes {stable_mosaic.version = 11 : i64} {
  func.func @_mm_kernel(%arg0: i32, %arg1: i32, %arg2: i32, %arg3: i32, %arg4: memref<1x256x256xbf16, #tpu.memory_space<vmem>>, %arg5: memref<1x256x128xbf16, #tpu.memory_space<vmem>>, %arg6: memref<1x1x128xf32, #tpu.memory_space<vmem>>, %arg7: memref<1x256x128xf32, #tpu.memory_space<vmem>>) attributes {dimension_semantics = [#tpu.dimension_semantics<parallel>, #tpu.dimension_semantics<parallel>, #tpu.dimension_semantics<parallel>, #tpu.dimension_semantics<arbitrary>], iteration_bounds = array<i64: 1, 2, 1, 1>, scalar_prefetch = 0 : i64, scratch_operands = 0 : i64, tpu.core_type = #tpu.core_type<tc>, window_params = [{transform_indices = @transform_0, window_bounds = array<i64: 1, 256, 256>}, {transform_indices = @transform_1, window_bounds = array<i64: 1, 256, 128>}, {transform_indices = @transform_2, window_bounds = array<i64: 1, 1, 128>}, {transform_indices = @transform_3, window_bounds = array<i64: 1, 256, 128>}]} {
    %c0_i32 = arith.constant 0 : i32
    %0 = arith.cmpi eq, %arg3, %c0_i32 : i32
    %1 = arith.extui %0 : i1 to i32
    %c0_i32_0 = arith.constant 0 : i32
    %2 = arith.cmpi ne, %1, %c0_i32_0 : i32
    scf.if %2 {
      %cst_14 = arith.constant 0.000000e+00 : f32
      %17 = vector.broadcast %cst_14 : f32 to vector<1x256x128xf32>
      %c0_15 = arith.constant 0 : index
      %c0_16 = arith.constant 0 : index
      %c0_17 = arith.constant 0 : index
      %18 = vector.load %arg7[%c0_15, %c0_16, %c0_17] : memref<1x256x128xf32, #tpu.memory_space<vmem>>, vector<1x256x128xf32>
      tpu.vector_store %arg7[%c0_15, %c0_16, %c0_17], %17 {strides = array<i32>} : memref<1x256x128xf32, #tpu.memory_space<vmem>>, vector<1x256x128xf32>,
    } else {
    }
    %c0 = arith.constant 0 : index
    %c0_1 = arith.constant 0 : index
    %c0_2 = arith.constant 0 : index
    %3 = vector.load %arg7[%c0, %c0_1, %c0_2] : memref<1x256x128xf32, #tpu.memory_space<vmem>>, vector<1x256x128xf32>
    %4 = vector.shape_cast %3 : vector<1x256x128xf32> to vector<256x128xf32>
    %c0_3 = arith.constant 0 : index
    %c0_4 = arith.constant 0 : index
    %c0_5 = arith.constant 0 : index
    %5 = vector.load %arg4[%c0_3, %c0_4, %c0_5] : memref<1x256x256xbf16, #tpu.memory_space<vmem>>, vector<1x256x256xbf16>
    %6 = vector.shape_cast %5 : vector<1x256x256xbf16> to vector<256x256xbf16>
    %c0_6 = arith.constant 0 : index
    %c0_7 = arith.constant 0 : index
    %c0_8 = arith.constant 0 : index
    %7 = vector.load %arg5[%c0_6, %c0_7, %c0_8] : memref<1x256x128xbf16, #tpu.memory_space<vmem>>, vector<1x256x128xbf16>
    %8 = vector.shape_cast %7 : vector<1x256x128xbf16> to vector<256x128xbf16>
    %cst = arith.constant dense<0.000000e+00> : vector<256x128xf32>
    %9 = tpu.matmul %6, %8, %cst {dimension_numbers = #tpu.dot_dimension_numbers<[1], [0], [0], [1], [0, 0, 1, 1], [], []>} : vector<256x256xbf16>, vector<256x128xbf16>, vector<256x128xf32> -> vector<256x128xf32>
    %10 = arith.addf %4, %9 : vector<256x128xf32>
    %c0_9 = arith.constant 0 : index
    %c0_10 = arith.constant 0 : index
    %c0_11 = arith.constant 0 : index
    %11 = vector.load %arg7[%c0_9, %c0_10, %c0_11] : memref<1x256x128xf32, #tpu.memory_space<vmem>>, vector<1x256x128xf32>
    %12 = vector.shape_cast %11 : vector<1x256x128xf32> to vector<256x128xf32>
    %13 = vector.shape_cast %10 : vector<256x128xf32> to vector<1x256x128xf32>
    tpu.vector_store %arg7[%c0_9, %c0_10, %c0_11], %13 {strides = array<i32>} : memref<1x256x128xf32, #tpu.memory_space<vmem>>, vector<1x256x128xf32>,
    %c0_i32_12 = arith.constant 0 : i32
    %14 = arith.cmpi eq, %arg3, %c0_i32_12 : i32
    %15 = arith.extui %14 : i1 to i32
    %c0_i32_13 = arith.constant 0 : i32
    %16 = arith.cmpi ne, %15, %c0_i32_13 : i32
    scf.if %16 {
      %c0_14 = arith.constant 0 : index
      %c0_15 = arith.constant 0 : index
      %c0_16 = arith.constant 0 : index
      %17 = vector.load %arg7[%c0_14, %c0_15, %c0_16] : memref<1x256x128xf32, #tpu.memory_space<vmem>>, vector<1x256x128xf32>
      %18 = vector.shape_cast %17 : vector<1x256x128xf32> to vector<256x128xf32>
      %c0_17 = arith.constant 0 : index
      %c0_18 = arith.constant 0 : index
      %c0_19 = arith.constant 0 : index
      %19 = vector.load %arg6[%c0_17, %c0_18, %c0_19] : memref<1x1x128xf32, #tpu.memory_space<vmem>>, vector<1x1x128xf32>
      %20 = vector.shape_cast %19 : vector<1x1x128xf32> to vector<1x128xf32>
      %21 = vector.broadcast %20 : vector<1x128xf32> to vector<256x128xf32>
      %22 = arith.addf %18, %21 : vector<256x128xf32>
      %cst_20 = arith.constant 0.000000e+00 : f32
      %23 = vector.broadcast %cst_20 : f32 to vector<256x128xf32>
      %24 = arith.maximumf %22, %23 : vector<256x128xf32>
      %c0_21 = arith.constant 0 : index
      %c0_22 = arith.constant 0 : index
      %c0_23 = arith.constant 0 : index
      %25 = vector.load %arg7[%c0_21, %c0_22, %c0_23] : memref<1x256x128xf32, #tpu.memory_space<vmem>>, vector<1x256x128xf32>
      %26 = vector.shape_cast %25 : vector<1x256x128xf32> to vector<256x128xf32>
      %27 = vector.shape_cast %24 : vector<256x128xf32> to vector<1x256x128xf32>
      tpu.vector_store %arg7[%c0_21, %c0_22, %c0_23], %27 {strides = array<i32>} : memref<1x256x128xf32, #tpu.memory_space<vmem>>, vector<1x256x128xf32>,
    } else {
    }
    return
  }
  func.func @transform_0(%arg0: i32, %arg1: i32, %arg2: i32, %arg3: i32) -> (i32, i32, i32) {
    %c0_i32 = arith.constant 0 : i32
    return %arg0, %arg1, %arg3 : i32, i32, i32
  }
  func.func @transform_1(%arg0: i32, %arg1: i32, %arg2: i32, %arg3: i32) -> (i32, i32, i32) {
    %c0_i32 = arith.constant 0 : i32
    return %arg0, %arg3, %arg2 : i32, i32, i32
  }
  func.func @transform_2(%arg0: i32, %arg1: i32, %arg2: i32, %arg3: i32) -> (i32, i32, i32) {
    %c0_i32 = arith.constant 0 : i32
    %c0_i32_0 = arith.constant 0 : i32
    return %arg0, %c0_i32, %arg2 : i32, i32, i32
  }
  func.func @transform_3(%arg0: i32, %arg1: i32, %arg2: i32, %arg3: i32) -> (i32, i32, i32) {
    %c0_i32 = arith.constant 0 : i32
    return %arg0, %arg1, %arg2 : i32, i32, i32
  }
}

module attributes {stable_mosaic.version = 11 : i64} {
  func.func @_max_over_rows_kernel(%arg0: i32, %arg1: memref<9x4096xf32, #tpu.memory_space<vmem>>, %arg2: memref<1x4096xf32, #tpu.memory_space<vmem>>) attributes {dimension_semantics = [#tpu.dimension_semantics<parallel>], iteration_bounds = array<i64: 2>, scalar_prefetch = 0 : i64, scratch_operands = 0 : i64, tpu.core_type = #tpu.core_type<tc>, window_params = [{transform_indices = @transform_0, window_bounds = array<i64: 9, 4096>}, {transform_indices = @transform_1, window_bounds = array<i64: 1, 4096>}]} {
    %c0 = arith.constant 0 : index
    %c0_0 = arith.constant 0 : index
    %0 = vector.load %arg1[%c0, %c0_0] : memref<9x4096xf32, #tpu.memory_space<vmem>>, vector<9x4096xf32>
    %cst = arith.constant dense<0xFF800000> : vector<4096xf32>
    %1 = vector.multi_reduction <maximumf>, %0, %cst [0] : vector<9x4096xf32> to vector<4096xf32>
    %2 = vector.shape_cast %1 : vector<4096xf32> to vector<1x4096xf32>
    %c0_1 = arith.constant 0 : index
    %c0_2 = arith.constant 0 : index
    %3 = vector.load %arg2[%c0_1, %c0_2] : memref<1x4096xf32, #tpu.memory_space<vmem>>, vector<1x4096xf32>
    tpu.vector_store %arg2[%c0_1, %c0_2], %2 {strides = array<i32>} : memref<1x4096xf32, #tpu.memory_space<vmem>>, vector<1x4096xf32>,
    return
  }
  func.func @transform_0(%arg0: i32) -> (i32, i32) {
    %c0_i32 = arith.constant 0 : i32
    %c0_i32_0 = arith.constant 0 : i32
    return %c0_i32, %arg0 : i32, i32
  }
  func.func @transform_1(%arg0: i32) -> (i32, i32) {
    %c0_i32 = arith.constant 0 : i32
    %c0_i32_0 = arith.constant 0 : i32
    return %c0_i32, %arg0 : i32, i32
  }
}

</mosaic_0001>

<llo_original>
// kernel: stem_forward.3
$region0: #{stem_forward.3}
  #allocation0 [shape = 'u32[]', space=smem, size = 0x4, offset = 0x4, fixed_abs, tag = 'smem constant byte address 0x4 - core index']
  #allocation1 [shape = 'u32[144,128]{1,0:T(1,128)}', space=vmem, size = 0x12000, scoped, tag = 'internal scratch']
  %s0 = inlined_call_operand.vmem [shape: f32[9,8192], index: 0, kind: input, shape index: {}]
  %s1 = inlined_call_operand.vmem [shape: f32[1,8192], index: 1, kind: output, shape index: {}]
  %s2 = sld [smem:[#allocation0]]
  $region60: #{stem_forward.3} parent=0
    _
  %s4 = ssub.s32 1, %s2
  %s5 = scalar_select 0, %s4, %s2
  $region1: #{stem_forward.3} parent=0
    #allocation2 [shape = 'u8[524288]{0}', space=vmem, size = 0x80000, scoped, tag = 'input window, operand 0']
    loop: start=0, step=1, limit=4
    $region2: #{stem_forward.3} parent=1 // loop_pre_header
      _
    $region3: #{stem_forward.3} parent=1 // loop_header
      %s7 = sphi 0, %s11
      %p8 = scmp.ge.s32.totalorder %s7, 4
      %s17 = sphi 0, %s19
      %s20 = sphi 0, %s17
      %s21 = sphi 0, %s20
      %s37 = sphi 0, %s21
      %s43 = sphi 0, %s45
      %s46 = sphi 0, %s43
      %s47 = sphi 0, %s46
      %s63 = sphi 0, %s47
    $region4: #{stem_forward.3} parent=1 // loop_header_branch
      %10 = sbr.rel (%p8) target = $region8
    $region5: #{stem_forward.3} parent=1 // loop_body
      %s12 = ssub.s32 %s7, 1
      %s13 = ssub.s32 %s7, 2
      %s14 = sadd.s32 %s7, 1
      %s15 = ssub.s32 %s7, %s14
      %p16 = scmp.eq.s32.totalorder %s15, 0
      %s18 = sadd.s32 %s17, 1
      %s19 = scalar_select %p16, %s17, %s18
      %p22 = pneg %p16
      %p23 = scmp.eq.s32.totalorder %s7, 1
      %p24 = por %p22, %p23
      %p25 = scmp.ne.s32.totalorder %s17, %s20
      %p26 = scmp.eq.s32.totalorder %s7, 0
      %p27 = por %p25, %p26
      %p28 = scmp.ne.s32.totalorder %s17, %s20
      %p29 = scmp.eq.s32.totalorder %s12, 1
      %p30 = por %p28, %p29
      %p31 = scmp.ne.s32.totalorder %s20, %s21
      %p32 = scmp.eq.s32.totalorder %s12, 0
      %p33 = por %p31, %p32
      %p34 = scmp.ne.s32.totalorder %s20, %s21
      %p35 = scmp.eq.s32.totalorder %s13, 1
      %p36 = por %p34, %p35
      %p38 = scmp.ne.s32.totalorder %s21, %s37
      %p39 = scmp.eq.s32.totalorder %s13, 0
      %p40 = por %p38, %p39
      %s41 = ssub.s32 %s7, %s14
      %p42 = scmp.eq.s32.totalorder %s41, 0
      %s44 = sadd.s32 %s43, 1
      %s45 = scalar_select %p42, %s43, %s44
      %p48 = pneg %p42
      %p49 = scmp.eq.s32.totalorder %s7, 1
      %p50 = por %p48, %p49
      %p51 = scmp.ne.s32.totalorder %s43, %s46
      %p52 = scmp.eq.s32.totalorder %s7, 0
      %p53 = por %p51, %p52
      %p54 = scmp.ne.s32.totalorder %s43, %s46
      %p55 = scmp.eq.s32.totalorder %s12, 1
      %p56 = por %p54, %p55
      %p57 = scmp.ne.s32.totalorder %s46, %s47
      %p58 = scmp.eq.s32.totalorder %s12, 0
      %p59 = por %p57, %p58
      %p60 = scmp.ne.s32.totalorder %s46, %s47
      %p61 = scmp.eq.s32.totalorder %s13, 1
      %p62 = por %p60, %p61
      %p64 = scmp.ne.s32.totalorder %s47, %s63
      %p65 = scmp.eq.s32.totalorder %s13, 0
      %p66 = por %p64, %p65
      %p67 = scmp.le.s32.totalorder 1, %s7
      %p68 = scmp.lt.s32.totalorder %s7, 3
      %p69 = pnand %p67, %p68
      %p70 = pneg %p69
      // Predicated region
      $region9: #{stem_forward.3} parent=5 // pred_check
        _
      $region10: #{stem_forward.3} parent=5 // pred_check_branch
        %72 = sbr.rel (%p69) target = $region12
      $region11: #{stem_forward.3} parent=5 // pred_region
        %s73 = ssub.s32 %s7, 1
      $region12: #{stem_forward.3} parent=5 // pred_fallthru
        _
      %p74 = scmp.lt.s32.totalorder %s7, 2
      // Predicated region
      $region13: #{stem_forward.3} parent=5 // pred_check
        %p75 = pneg %p74
      $region14: #{stem_forward.3} parent=5 // pred_check_branch
        %77 = sbr.rel (%p75) target = $region16
      $region15: #{stem_forward.3} parent=5 // pred_region
        // Predicated region
        $region17: #{stem_forward.3} parent=15 // pred_check
          %p78 = pneg %p27
        $region18: #{stem_forward.3} parent=15 // pred_check_branch
          %80 = sbr.rel (%p78) target = $region20
        $region19: #{stem_forward.3} parent=15 // pred_region
          %s81 = sand.u32 %s17, 1
          %s82 = sand.u32 %s17, 1
          %s83 = smul.addr %s82, 512
          %s84 = scalar_lea.vmem [#allocation2], %s83
          %s85 = smul.u32 32, %s7
          %s86 = smul.addr %s85, 8
          %s87 = scalar_lea.vmem %s0, %s86
          // Predicated region
          $region21: #{stem_forward.3} parent=19 // pred_check
            _
          $region22: #{stem_forward.3} parent=19 // pred_check_branch
            %89 = sbr.rel (0) target = $region24
          $region23: #{stem_forward.3} parent=19 // pred_region
            // Predicated region
            $region25: #{stem_forward.3} parent=23 // pred_check
              _
            $region26: #{stem_forward.3} parent=23 // pred_check_branch
              %91 = sbr.rel (0) target = $region28
            $region27: #{stem_forward.3} parent=23 // pred_region
              loop: start=0, step=1, limit=1
              $region29: #{stem_forward.3} parent=27 // loop_pre_header
                _
              $region30: #{stem_forward.3} parent=27 // loop_header
                %s93 = sphi 0, %s97
                %p94 = scmp.ge.s32.totalorder %s93, 1
                %s98 = sphi %s87, %s87
                %s99 = sphi %s84, %s84
              $region31: #{stem_forward.3} parent=27 // loop_header_branch
                %96 = sbr.rel (%p94) target = $region35
              $region32: #{stem_forward.3} parent=27 // loop_body
                %v100 = vld [vmem:[%s98] sm:$0xff]
                %101 = vst [vmem:[%s99] sm:$0xff] %v100
                %v102 = vld [vmem:[%s98 + $0x8] sm:$0xff]
                %103 = vst [vmem:[%s99 + $0x8] sm:$0xff] %v102
                %v104 = vld [vmem:[%s98 + $0x10] sm:$0xff]
                %105 = vst [vmem:[%s99 + $0x10] sm:$0xff] %v104
                %v106 = vld [vmem:[%s98 + $0x18] sm:$0xff]
                %107 = vst [vmem:[%s99 + $0x18] sm:$0xff] %v106
                %v108 = vld [vmem:[%s98 + $0x20] sm:$0xff]
                %109 = vst [vmem:[%s99 + $0x20] sm:$0xff] %v108
                %v110 = vld [vmem:[%s98 + $0x28] sm:$0xff]
                %111 = vst [vmem:[%s99 + $0x28] sm:$0xff] %v110
                %v112 = vld [vmem:[%s98 + $0x30] sm:$0xff]
                %113 = vst [vmem:[%s99 + $0x30] sm:$0xff] %v112
                %v114 = vld [vmem:[%s98 + $0x38] sm:$0xff]
                %115 = vst [vmem:[%s99 + $0x38] sm:$0xff] %v114
                %v116 = vld [vmem:[%s98 + $0x40] sm:$0xff]
                %117 = vst [vmem:[%s99 + $0x40] sm:$0xff] %v116
                %v118 = vld [vmem:[%s98 + $0x48] sm:$0xff]
                %119 = vst [vmem:[%s99 + $0x48] sm:$0xff] %v118
                %v120 = vld [vmem:[%s98 + $0x50] sm:$0xff]
                %121 = vst [vmem:[%s99 + $0x50] sm:$0xff] %v120
                %v122 = vld [vmem:[%s98 + $0x58] sm:$0xff]
                %123 = vst [vmem:[%s99 + $0x58] sm:$0xff] %v122
                %v124 = vld [vmem:[%s98 + $0x60] sm:$0xff]
                %125 = vst [vmem:[%s99 + $0x60] sm:$0xff] %v124
                %v126 = vld [vmem:[%s98 + $0x68] sm:$0xff]
                %127 = vst [vmem:[%s99 + $0x68] sm:$0xff] %v126
                %v128 = vld [vmem:[%s98 + $0x70] sm:$0xff]
                %129 = vst [vmem:[%s99 + $0x70] sm:$0xff] %v128
                %v130 = vld [vmem:[%s98 + $0x78] sm:$0xff]
                %131 = vst [vmem:[%s99 + $0x78] sm:$0xff] %v130
                %v132 = vld [vmem:[%s98 + $0x80] sm:$0xff]
                %133 = vst [vmem:[%s99 + $0x80] sm:$0xff] %v132
                %v134 = vld [vmem:[%s98 + $0x88] sm:$0xff]
                %135 = vst [vmem:[%s99 + $0x88] sm:$0xff] %v134
                %v136 = vld [vmem:[%s98 + $0x90] sm:$0xff]
                %137 = vst [vmem:[%s99 + $0x90] sm:$0xff] %v136
                %v138 = vld [vmem:[%s98 + $0x98] sm:$0xff]
                %139 = vst [vmem:[%s99 + $0x98] sm:$0xff] %v138
                %v140 = vld [vmem:[%s98 + $0xa0] sm:$0xff]
                %141 = vst [vmem:[%s99 + $0xa0] sm:$0xff] %v140
                %v142 = vld [vmem:[%s98 + $0xa8] sm:$0xff]
                %143 = vst [vmem:[%s99 + $0xa8] sm:$0xff] %v142
                %v144 = vld [vmem:[%s98 + $0xb0] sm:$0xff]
                %145 = vst [vmem:[%s99 + $0xb0] sm:$0xff] %v144
                %v146 = vld [vmem:[%s98 + $0xb8] sm:$0xff]
                %147 = vst [vmem:[%s99 + $0xb8] sm:$0xff] %v146
                %v148 = vld [vmem:[%s98 + $0xc0] sm:$0xff]
                %149 = vst [vmem:[%s99 + $0xc0] sm:$0xff] %v148
                %v150 = vld [vmem:[%s98 + $0xc8] sm:$0xff]
                %151 = vst [vmem:[%s99 + $0xc8] sm:$0xff] %v150
                %v152 = vld [vmem:[%s98 + $0xd0] sm:$0xff]
                %153 = vst [vmem:[%s99 + $0xd0] sm:$0xff] %v152
                %v154 = vld [vmem:[%s98 + $0xd8] sm:$0xff]
                %155 = vst [vmem:[%s99 + $0xd8] sm:$0xff] %v154
                %v156 = vld [vmem:[%s98 + $0xe0] sm:$0xff]
                %157 = vst [vmem:[%s99 + $0xe0] sm:$0xff] %v156
                %v158 = vld [vmem:[%s98 + $0xe8] sm:$0xff]
                %159 = vst [vmem:[%s99 + $0xe8] sm:$0xff] %v158
                %v160 = vld [vmem:[%s98 + $0xf0] sm:$0xff]
                %161 = vst [vmem:[%s99 + $0xf0] sm:$0xff] %v160
                %v162 = vld [vmem:[%s98 + $0xf8] sm:$0xff]
                %163 = vst [vmem:[%s99 + $0xf8] sm:$0xff] %v162
                %v164 = vld [vmem:[%s98 + $0x200] sm:$0xff]
                %165 = vst [vmem:[%s99 + $0x100] sm:$0xff] %v164
                %v166 = vld [vmem:[%s98 + $0x208] sm:$0xff]
                %167 = vst [vmem:[%s99 + $0x108] sm:$0xff] %v166
                %v168 = vld [vmem:[%s98 + $0x210] sm:$0xff]
                %169 = vst [vmem:[%s99 + $0x110] sm:$0xff] %v168
                %v170 = vld [vmem:[%s98 + $0x218] sm:$0xff]
                %171 = vst [vmem:[%s99 + $0x118] sm:$0xff] %v170
                %v172 = vld [vmem:[%s98 + $0x220] sm:$0xff]
                %173 = vst [vmem:[%s99 + $0x120] sm:$0xff] %v172
                %v174 = vld [vmem:[%s98 + $0x228] sm:$0xff]
                %175 = vst [vmem:[%s99 + $0x128] sm:$0xff] %v174
                %v176 = vld [vmem:[%s98 + $0x230] sm:$0xff]
                %177 = vst [vmem:[%s99 + $0x130] sm:$0xff] %v176
                %v178 = vld [vmem:[%s98 + $0x238] sm:$0xff]
                %179 = vst [vmem:[%s99 + $0x138] sm:$0xff] %v178
                %v180 = vld [vmem:[%s98 + $0x240] sm:$0xff]
                %181 = vst [vmem:[%s99 + $0x140] sm:$0xff] %v180
                %v182 = vld [vmem:[%s98 + $0x248] sm:$0xff]
                %183 = vst [vmem:[%s99 + $0x148] sm:$0xff] %v182
                %v184 = vld [vmem:[%s98 + $0x250] sm:$0xff]
                %185 = vst [vmem:[%s99 + $0x150] sm:$0xff] %v184
                %v186 = vld [vmem:[%s98 + $0x258] sm:$0xff]
                %187 = vst [vmem:[%s99 + $0x158] sm:$0xff] %v186
                %v188 = vld [vmem:[%s98 + $0x260] sm:$0xff]
                %189 = vst [vmem:[%s99 + $0x160] sm:$0xff] %v188
                %v190 = vld [vmem:[%s98 + $0x268] sm:$0xff]
                %191 = vst [vmem:[%s99 + $0x168] sm:$0xff] %v190
                %v192 = vld [vmem:[%s98 + $0x270] sm:$0xff]
                %193 = vst [vmem:[%s99 + $0x170] sm:$0xff] %v192
                %v194 = vld [vmem:[%s98 + $0x278] sm:$0xff]
                %195 = vst [vmem:[%s99 + $0x178] sm:$0xff] %v194
                %v196 = vld [vmem:[%s98 + $0x280] sm:$0xff]
                %197 = vst [vmem:[%s99 + $0x180] sm:$0xff] %v196
                %v198 = vld [vmem:[%s98 + $0x288] sm:$0xff]
                %199 = vst [vmem:[%s99 + $0x188] sm:$0xff] %v198
                %v200 = vld [vmem:[%s98 + $0x290] sm:$0xff]
                %201 = vst [vmem:[%s99 + $0x190] sm:$0xff] %v200
                %v202 = vld [vmem:[%s98 + $0x298] sm:$0xff]
                %203 = vst [vmem:[%s99 + $0x198] sm:$0xff] %v202
                %v204 = vld [vmem:[%s98 + $0x2a0] sm:$0xff]
                %205 = vst [vmem:[%s99 + $0x1a0] sm:$0xff] %v204
                %v206 = vld [vmem:[%s98 + $0x2a8] sm:$0xff]
                %207 = vst [vmem:[%s99 + $0x1a8] sm:$0xff] %v206
                %v208 = vld [vmem:[%s98 + $0x2b0] sm:$0xff]
                %209 = vst [vmem:[%s99 + $0x1b0] sm:$0xff] %v208
                %v210 = vld [vmem:[%s98 + $0x2b8] sm:$0xff]
                %211 = vst [vmem:[%s99 + $0x1b8] sm:$0xff] %v210
                %v212 = vld [vmem:[%s98 + $0x2c0] sm:$0xff]
                %213 = vst [vmem:[%s99 + $0x1c0] sm:$0xff] %v212
                %v214 = vld [vmem:[%s98 + $0x2c8] sm:$0xff]
                %215 = vst [vmem:[%s99 + $0x1c8] sm:$0xff] %v214
                %v216 = vld [vmem:[%s98 + $0x2d0] sm:$0xff]
                %217 = vst [vmem:[%s99 + $0x1d0] sm:$0xff] %v216
                %v218 = vld [vmem:[%s98 + $0x2d8] sm:$0xff]
                %219 = vst [vmem:[%s99 + $0x1d8] sm:$0xff] %v218
                %v220 = vld [vmem:[%s98 + $0x2e0] sm:$0xff]
                %221 = vst [vmem:[%s99 + $0x1e0] sm:$0xff] %v220
                %v222 = vld [vmem:[%s98 + $0x2e8] sm:$0xff]
                %223 = vst [vmem:[%s99 + $0x1e8] sm:$0xff] %v222
                %v224 = vld [vmem:[%s98 + $0x2f0] sm:$0xff]
                %225 = vst [vmem:[%s99 + $0x1f0] sm:$0xff] %v224
                %v226 = vld [vmem:[%s98 + $0x2f8] sm:$0xff]
                %227 = vst [vmem:[%s99 + $0x1f8] sm:$0xff] %v226
              $region33: #{stem_forward.3} parent=27 // loop_footer
                %s97 = sadd.s32 1, %s93
              $region34: #{stem_forward.3} parent=27 // loop_footer_branch
                %92 = sbr.rel target = $region30
              $region35: #{stem_forward.3} parent=27 // loop_exit
                _
            $region28: #{stem_forward.3} parent=23 // pred_fallthru
              _
            // Predicated region
            $region36: #{stem_forward.3} parent=23 // pred_check
              _
            $region37: #{stem_forward.3} parent=23 // pred_check_branch
              %229 = sbr.rel target = $region39
            $region38: #{stem_forward.3} parent=23 // pred_region
              _
            $region39: #{stem_forward.3} parent=23 // pred_fallthru
              _
          $region24: #{stem_forward.3} parent=19 // pred_fallthru
            _
          %230 = vnop
        $region20: #{stem_forward.3} parent=15 // pred_fallthru
          _
      $region16: #{stem_forward.3} parent=5 // pred_fallthru
        _
      %p231 = scmp.le.s32.totalorder 1, %s7
      %p232 = scmp.lt.s32.totalorder %s7, 3
      %p233 = pnand %p231, %p232
      %p234 = pneg %p233
      // Predicated region
      $region40: #{stem_forward.3} parent=5 // pred_check
        _
      $region41: #{stem_forward.3} parent=5 // pred_check_branch
        %236 = sbr.rel (%p233) target = $region43
      $region42: #{stem_forward.3} parent=5 // pred_region
        %s237 = ssub.s32 %s7, 1
        %s238 = sand.u32 %s20, 1
        %s239 = sand.u32 %s20, 1
        %s240 = smul.addr %s239, 512
        %s241 = scalar_lea.vmem [#allocation2], %s240
        // Predicated region
        $region44: #{stem_forward.3} parent=42 // pred_check
          %p242 = pneg %p33
        $region45: #{stem_forward.3} parent=42 // pred_check_branch
          %244 = sbr.rel (%p242) target = $region47
        $region46: #{stem_forward.3} parent=42 // pred_region
          _
        $region47: #{stem_forward.3} parent=42 // pred_fallthru
          _
        %s245 = sand.u32 %s20, 1
        %s246 = sand.u32 %s20, 1
        %s247 = smul.addr %s246, 512
        %s248 = scalar_lea.vmem [#allocation2], %s247
        %p249 = pneg %p33
        %p250 = pneg %p30
        %p251 = pneg %p59
        %p252 = pneg %p56
        %s253 = smul.u32 32, %s12
        %p254 = scmp.lt.s32.totalorder %s253, 63
        %s255 = scalar_select %p254, %s253, 63
        %s256 = scalar_lea.vmem %s1, %s255
        %s257 = smul.u32 32, %s12
        %s258 = smul.u32 32, %s12
        %p259 = scmp.lt.s32.totalorder %s258, 63
        %s260 = scalar_select %p259, %s258, 63
        %s261 = scalar_lea.vmem %s1, %s260
        %s262 = smul.u32 32, %s12
        %v263 = vld [vmem:[%s241] sm:$0xff]
        %v264 = vld [vmem:[%s241 + $0x8] sm:$0xff]
        %v265 = vld [vmem:[%s241 + $0x10] sm:$0xff]
        %v266 = vld [vmem:[%s241 + $0x18] sm:$0xff]
        %v267 = vld [vmem:[%s241 + $0x20] sm:$0xff]
        %v268 = vld [vmem:[%s241 + $0x28] sm:$0xff]
        %v269 = vld [vmem:[%s241 + $0x30] sm:$0xff]
        %v270 = vld [vmem:[%s241 + $0x38] sm:$0xff]
        %v271 = vld [vmem:[%s241 + $0x40] sm:$0xff]
        %v272 = vld [vmem:[%s241 + $0x48] sm:$0xff]
        %v273 = vld [vmem:[%s241 + $0x50] sm:$0xff]
        %v274 = vld [vmem:[%s241 + $0x58] sm:$0xff]
        %v275 = vld [vmem:[%s241 + $0x60] sm:$0xff]
        %v276 = vld [vmem:[%s241 + $0x68] sm:$0xff]
        %v277 = vld [vmem:[%s241 + $0x70] sm:$0xff]
        %v278 = vld [vmem:[%s241 + $0x78] sm:$0xff]
        %v279 = vld [vmem:[%s241 + $0x80] sm:$0xff]
        %v280 = vld [vmem:[%s241 + $0x88] sm:$0xff]
        %v281 = vld [vmem:[%s241 + $0x90] sm:$0xff]
        %v282 = vld [vmem:[%s241 + $0x98] sm:$0xff]
        %v283 = vld [vmem:[%s241 + $0xa0] sm:$0xff]
        %v284 = vld [vmem:[%s241 + $0xa8] sm:$0xff]
        %v285 = vld [vmem:[%s241 + $0xb0] sm:$0xff]
        %v286 = vld [vmem:[%s241 + $0xb8] sm:$0xff]
        %v287 = vld [vmem:[%s241 + $0xc0] sm:$0xff]
        %v288 = vld [vmem:[%s241 + $0xc8] sm:$0xff]
        %v289 = vld [vmem:[%s241 + $0xd0] sm:$0xff]
        %v290 = vld [vmem:[%s241 + $0xd8] sm:$0xff]
        %v291 = vld [vmem:[%s241 + $0xe0] sm:$0xff]
        %v292 = vld [vmem:[%s241 + $0xe8] sm:$0xff]
        %v293 = vld [vmem:[%s241 + $0xf0] sm:$0xff]
        %v294 = vld [vmem:[%s241 + $0xf8] sm:$0xff]
        %v295 = vld [vmem:[%s241 + $0x100] sm:$0x1]
        %v296 = vld [vmem:[%s241 + $0x108] sm:$0x1]
        %v297 = vld [vmem:[%s241 + $0x110] sm:$0x1]
        %v298 = vld [vmem:[%s241 + $0x118] sm:$0x1]
        %v299 = vld [vmem:[%s241 + $0x120] sm:$0x1]
        %v300 = vld [vmem:[%s241 + $0x128] sm:$0x1]
        %v301 = vld [vmem:[%s241 + $0x130] sm:$0x1]
        %v302 = vld [vmem:[%s241 + $0x138] sm:$0x1]
        %v303 = vld [vmem:[%s241 + $0x140] sm:$0x1]
        %v304 = vld [vmem:[%s241 + $0x148] sm:$0x1]
        %v305 = vld [vmem:[%s241 + $0x150] sm:$0x1]
        %v306 = vld [vmem:[%s241 + $0x158] sm:$0x1]
        %v307 = vld [vmem:[%s241 + $0x160] sm:$0x1]
        %v308 = vld [vmem:[%s241 + $0x168] sm:$0x1]
        %v309 = vld [vmem:[%s241 + $0x170] sm:$0x1]
        %v310 = vld [vmem:[%s241 + $0x178] sm:$0x1]
        %v311 = vld [vmem:[%s241 + $0x180] sm:$0x1]
        %v312 = vld [vmem:[%s241 + $0x188] sm:$0x1]
        %v313 = vld [vmem:[%s241 + $0x190] sm:$0x1]
        %v314 = vld [vmem:[%s241 + $0x198] sm:$0x1]
        %v315 = vld [vmem:[%s241 + $0x1a0] sm:$0x1]
        %v316 = vld [vmem:[%s241 + $0x1a8] sm:$0x1]
        %v317 = vld [vmem:[%s241 + $0x1b0] sm:$0x1]
        %v318 = vld [vmem:[%s241 + $0x1b8] sm:$0x1]
        %v319 = vld [vmem:[%s241 + $0x1c0] sm:$0x1]
        %v320 = vld [vmem:[%s241 + $0x1c8] sm:$0x1]
        %v321 = vld [vmem:[%s241 + $0x1d0] sm:$0x1]
        %v322 = vld [vmem:[%s241 + $0x1d8] sm:$0x1]
        %v323 = vld [vmem:[%s241 + $0x1e0] sm:$0x1]
        %v324 = vld [vmem:[%s241 + $0x1e8] sm:$0x1]
        %v325 = vld [vmem:[%s241 + $0x1f0] sm:$0x1]
        %v326 = vld [vmem:[%s241 + $0x1f8] sm:$0x1]
        %vm327 = vcmask 1040384
        %v328 = vsel %vm327, %v295, -inf
        %v329 = vmax.f32 %v263, %v328
        %v330 = vrot.slane %v329, 4
        %v331 = vmax.f32 %v329, %v330
        %v332 = vrot.slane %v331, 2
        %v333 = vmax.f32 %v331, %v332
        %v334 = vrot.slane %v333, 1
        %v335 = vmax.f32 %v333, %v334
        %v336 = vsel %vm327, %v296, -inf
        %v337 = vmax.f32 %v264, %v336
        %v338 = vrot.slane %v337, 4
        %v339 = vmax.f32 %v337, %v338
        %v340 = vrot.slane %v339, 2
        %v341 = vmax.f32 %v339, %v340
        %v342 = vrot.slane %v341, 1
        %v343 = vmax.f32 %v341, %v342
        %v344 = vsel %vm327, %v297, -inf
        %v345 = vmax.f32 %v265, %v344
        %v346 = vrot.slane %v345, 4
        %v347 = vmax.f32 %v345, %v346
        %v348 = vrot.slane %v347, 2
        %v349 = vmax.f32 %v347, %v348
        %v350 = vrot.slane %v349, 1
        %v351 = vmax.f32 %v349, %v350
        %v352 = vsel %vm327, %v298, -inf
        %v353 = vmax.f32 %v266, %v352
        %v354 = vrot.slane %v353, 4
        %v355 = vmax.f32 %v353, %v354
        %v356 = vrot.slane %v355, 2
        %v357 = vmax.f32 %v355, %v356
        %v358 = vrot.slane %v357, 1
        %v359 = vmax.f32 %v357, %v358
        %v360 = vsel %vm327, %v299, -inf
        %v361 = vmax.f32 %v267, %v360
        %v362 = vrot.slane %v361, 4
        %v363 = vmax.f32 %v361, %v362
        %v364 = vrot.slane %v363, 2
        %v365 = vmax.f32 %v363, %v364
        %v366 = vrot.slane %v365, 1
        %v367 = vmax.f32 %v365, %v366
        %v368 = vsel %vm327, %v300, -inf
        %v369 = vmax.f32 %v268, %v368
        %v370 = vrot.slane %v369, 4
        %v371 = vmax.f32 %v369, %v370
        %v372 = vrot.slane %v371, 2
        %v373 = vmax.f32 %v371, %v372
        %v374 = vrot.slane %v373, 1
        %v375 = vmax.f32 %v373, %v374
        %v376 = vsel %vm327, %v301, -inf
        %v377 = vmax.f32 %v269, %v376
        %v378 = vrot.slane %v377, 4
        %v379 = vmax.f32 %v377, %v378
        %v380 = vrot.slane %v379, 2
        %v381 = vmax.f32 %v379, %v380
        %v382 = vrot.slane %v381, 1
        %v383 = vmax.f32 %v381, %v382
        %v384 = vsel %vm327, %v302, -inf
        %v385 = vmax.f32 %v270, %v384
        %v386 = vrot.slane %v385, 4
        %v387 = vmax.f32 %v385, %v386
        %v388 = vrot.slane %v387, 2
        %v389 = vmax.f32 %v387, %v388
        %v390 = vrot.slane %v389, 1
        %v391 = vmax.f32 %v389, %v390
        %v392 = vsel %vm327, %v303, -inf
        %v393 = vmax.f32 %v271, %v392
        %v394 = vrot.slane %v393, 4
        %v395 = vmax.f32 %v393, %v394
        %v396 = vrot.slane %v395, 2
        %v397 = vmax.f32 %v395, %v396
        %v398 = vrot.slane %v397, 1
        %v399 = vmax.f32 %v397, %v398
        %v400 = vsel %vm327, %v304, -inf
        %v401 = vmax.f32 %v272, %v400
        %v402 = vrot.slane %v401, 4
        %v403 = vmax.f32 %v401, %v402
        %v404 = vrot.slane %v403, 2
        %v405 = vmax.f32 %v403, %v404
        %v406 = vrot.slane %v405, 1
        %v407 = vmax.f32 %v405, %v406
        %v408 = vsel %vm327, %v305, -inf
        %v409 = vmax.f32 %v273, %v408
        %v410 = vrot.slane %v409, 4
        %v411 = vmax.f32 %v409, %v410
        %v412 = vrot.slane %v411, 2
        %v413 = vmax.f32 %v411, %v412
        %v414 = vrot.slane %v413, 1
        %v415 = vmax.f32 %v413, %v414
        %v416 = vsel %vm327, %v306, -inf
        %v417 = vmax.f32 %v274, %v416
        %v418 = vrot.slane %v417, 4
        %v419 = vmax.f32 %v417, %v418
        %v420 = vrot.slane %v419, 2
        %v421 = vmax.f32 %v419, %v420
        %v422 = vrot.slane %v421, 1
        %v423 = vmax.f32 %v421, %v422
        %v424 = vsel %vm327, %v307, -inf
        %v425 = vmax.f32 %v275, %v424
        %v426 = vrot.slane %v425, 4
        %v427 = vmax.f32 %v425, %v426
        %v428 = vrot.slane %v427, 2
        %v429 = vmax.f32 %v427, %v428
        %v430 = vrot.slane %v429, 1
        %v431 = vmax.f32 %v429, %v430
        %v432 = vsel %vm327, %v308, -inf
        %v433 = vmax.f32 %v276, %v432
        %v434 = vrot.slane %v433, 4
        %v435 = vmax.f32 %v433, %v434
        %v436 = vrot.slane %v435, 2
        %v437 = vmax.f32 %v435, %v436
        %v438 = vrot.slane %v437, 1
        %v439 = vmax.f32 %v437, %v438
        %v440 = vsel %vm327, %v309, -inf
        %v441 = vmax.f32 %v277, %v440
        %v442 = vrot.slane %v441, 4
        %v443 = vmax.f32 %v441, %v442
        %v444 = vrot.slane %v443, 2
        %v445 = vmax.f32 %v443, %v444
        %v446 = vrot.slane %v445, 1
        %v447 = vmax.f32 %v445, %v446
        %v448 = vsel %vm327, %v310, -inf
        %v449 = vmax.f32 %v278, %v448
        %v450 = vrot.slane %v449, 4
        %v451 = vmax.f32 %v449, %v450
        %v452 = vrot.slane %v451, 2
        %v453 = vmax.f32 %v451, %v452
        %v454 = vrot.slane %v453, 1
        %v455 = vmax.f32 %v453, %v454
        %v456 = vsel %vm327, %v311, -inf
        %v457 = vmax.f32 %v279, %v456
        %v458 = vrot.slane %v457, 4
        %v459 = vmax.f32 %v457, %v458
        %v460 = vrot.slane %v459, 2
        %v461 = vmax.f32 %v459, %v460
        %v462 = vrot.slane %v461, 1
        %v463 = vmax.f32 %v461, %v462
        %v464 = vsel %vm327, %v312, -inf
        %v465 = vmax.f32 %v280, %v464
        %v466 = vrot.slane %v465, 4
        %v467 = vmax.f32 %v465, %v466
        %v468 = vrot.slane %v467, 2
        %v469 = vmax.f32 %v467, %v468
        %v470 = vrot.slane %v469, 1
        %v471 = vmax.f32 %v469, %v470
        %v472 = vsel %vm327, %v313, -inf
        %v473 = vmax.f32 %v281, %v472
        %v474 = vrot.slane %v473, 4
        %v475 = vmax.f32 %v473, %v474
        %v476 = vrot.slane %v475, 2
        %v477 = vmax.f32 %v475, %v476
        %v478 = vrot.slane %v477, 1
        %v479 = vmax.f32 %v477, %v478
        %v480 = vsel %vm327, %v314, -inf
        %v481 = vmax.f32 %v282, %v480
        %v482 = vrot.slane %v481, 4
        %v483 = vmax.f32 %v481, %v482
        %v484 = vrot.slane %v483, 2
        %v485 = vmax.f32 %v483, %v484
        %v486 = vrot.slane %v485, 1
        %v487 = vmax.f32 %v485, %v486
        %v488 = vsel %vm327, %v315, -inf
        %v489 = vmax.f32 %v283, %v488
        %v490 = vrot.slane %v489, 4
        %v491 = vmax.f32 %v489, %v490
        %v492 = vrot.slane %v491, 2
        %v493 = vmax.f32 %v491, %v492
        %v494 = vrot.slane %v493, 1
        %v495 = vmax.f32 %v493, %v494
        %v496 = vsel %vm327, %v316, -inf
        %v497 = vmax.f32 %v284, %v496
        %v498 = vrot.slane %v497, 4
        %v499 = vmax.f32 %v497, %v498
        %v500 = vrot.slane %v499, 2
        %v501 = vmax.f32 %v499, %v500
        %v502 = vrot.slane %v501, 1
        %v503 = vmax.f32 %v501, %v502
        %v504 = vsel %vm327, %v317, -inf
        %v505 = vmax.f32 %v285, %v504
        %v506 = vrot.slane %v505, 4
        %v507 = vmax.f32 %v505, %v506
        %v508 = vrot.slane %v507, 2
        %v509 = vmax.f32 %v507, %v508
        %v510 = vrot.slane %v509, 1
        %v511 = vmax.f32 %v509, %v510
        %v512 = vsel %vm327, %v318, -inf
        %v513 = vmax.f32 %v286, %v512
        %v514 = vrot.slane %v513, 4
        %v515 = vmax.f32 %v513, %v514
        %v516 = vrot.slane %v515, 2
        %v517 = vmax.f32 %v515, %v516
        %v518 = vrot.slane %v517, 1
        %v519 = vmax.f32 %v517, %v518
        %v520 = vsel %vm327, %v319, -inf
        %v521 = vmax.f32 %v287, %v520
        %v522 = vrot.slane %v521, 4
        %v523 = vmax.f32 %v521, %v522
        %v524 = vrot.slane %v523, 2
        %v525 = vmax.f32 %v523, %v524
        %v526 = vrot.slane %v525, 1
        %v527 = vmax.f32 %v525, %v526
        %v528 = vsel %vm327, %v320, -inf
        %v529 = vmax.f32 %v288, %v528
        %v530 = vrot.slane %v529, 4
        %v531 = vmax.f32 %v529, %v530
        %v532 = vrot.slane %v531, 2
        %v533 = vmax.f32 %v531, %v532
        %v534 = vrot.slane %v533, 1
        %v535 = vmax.f32 %v533, %v534
        %v536 = vsel %vm327, %v321, -inf
        %v537 = vmax.f32 %v289, %v536
        %v538 = vrot.slane %v537, 4
        %v539 = vmax.f32 %v537, %v538
        %v540 = vrot.slane %v539, 2
        %v541 = vmax.f32 %v539, %v540
        %v542 = vrot.slane %v541, 1
        %v543 = vmax.f32 %v541, %v542
        %v544 = vsel %vm327, %v322, -inf
        %v545 = vmax.f32 %v290, %v544
        %v546 = vrot.slane %v545, 4
        %v547 = vmax.f32 %v545, %v546
        %v548 = vrot.slane %v547, 2
        %v549 = vmax.f32 %v547, %v548
        %v550 = vrot.slane %v549, 1
        %v551 = vmax.f32 %v549, %v550
        %v552 = vsel %vm327, %v323, -inf
        %v553 = vmax.f32 %v291, %v552
        %v554 = vrot.slane %v553, 4
        %v555 = vmax.f32 %v553, %v554
        %v556 = vrot.slane %v555, 2
        %v557 = vmax.f32 %v555, %v556
        %v558 = vrot.slane %v557, 1
        %v559 = vmax.f32 %v557, %v558
        %v560 = vsel %vm327, %v324, -inf
        %v561 = vmax.f32 %v292, %v560
        %v562 = vrot.slane %v561, 4
        %v563 = vmax.f32 %v561, %v562
        %v564 = vrot.slane %v563, 2
        %v565 = vmax.f32 %v563, %v564
        %v566 = vrot.slane %v565, 1
        %v567 = vmax.f32 %v565, %v566
        %v568 = vsel %vm327, %v325, -inf
        %v569 = vmax.f32 %v293, %v568
        %v570 = vrot.slane %v569, 4
        %v571 = vmax.f32 %v569, %v570
        %v572 = vrot.slane %v571, 2
        %v573 = vmax.f32 %v571, %v572
        %v574 = vrot.slane %v573, 1
        %v575 = vmax.f32 %v573, %v574
        %v576 = vsel %vm327, %v326, -inf
        %v577 = vmax.f32 %v294, %v576
        %v578 = vrot.slane %v577, 4
        %v579 = vmax.f32 %v577, %v578
        %v580 = vrot.slane %v579, 2
        %v581 = vmax.f32 %v579, %v580
        %v582 = vrot.slane %v581, 1
        %v583 = vmax.f32 %v581, %v582
        %v616 = vcombine.low %v335, %v343
        %v617 = vcombine.low %v351, %v359
        %v618 = vcombine.low %v367, %v375
        %v619 = vcombine.low %v383, %v391
        %v621 = vunpack.c.l.s4 1966171168
        %v622 = vunpack.c.0.s8 %v621
        %v623 = vlaneseq
        %v624 = vshrl.u32 %v623, 7
        %v625 = vsub.s32 %v622, %v624
        %v626 = vrot.slane %v616, %v625
        %v628 = vunpack.c.l.s4 1966171168
        %v629 = vunpack.c.0.s8 %v628
        %v630 = vlaneseq
        %v631 = vshrl.u32 %v630, 7
        %v632 = vsub.s32 %v629, %v631
        %v633 = vrot.slane %v617, %v632
        %v635 = vunpack.c.l.s4 1966171168
        %v636 = vunpack.c.0.s8 %v635
        %v637 = vlaneseq
        %v638 = vshrl.u32 %v637, 7
        %v639 = vsub.s32 %v636, %v638
        %v640 = vrot.slane %v618, %v639
        %v642 = vunpack.c.l.s4 1966171168
        %v643 = vunpack.c.0.s8 %v642
        %v644 = vlaneseq
        %v645 = vshrl.u32 %v644, 7
        %v646 = vsub.s32 %v643, %v645
        %v647 = vrot.slane %v619, %v646
        %v648 = vcombine.low %v626, %v633
        %v649 = vcombine.low %v640, %v647
        %v651 = vunpack.c.l.s4 1966171168
        %v652 = vunpack.c.0.s8 %v651
        %v653 = vlaneseq
        %v654 = vshrl.u32 %v653, 7
        %v655 = vsub.s32 %v652, %v654
        %v656 = vrot.slane %v648, %v655
        %v658 = vunpack.c.l.s4 1966171168
        %v659 = vunpack.c.0.s8 %v658
        %v660 = vlaneseq
        %v661 = vshrl.u32 %v660, 7
        %v662 = vsub.s32 %v659, %v661
        %v663 = vrot.slane %v649, %v662
        %v664 = vcombine.low %v656, %v663
        %v665 = vcombine.low %v399, %v407
        %v666 = vcombine.low %v415, %v423
        %v667 = vcombine.low %v431, %v439
        %v668 = vcombine.low %v447, %v455
        %v670 = vunpack.c.l.s4 1966171168
        %v671 = vunpack.c.0.s8 %v670
        %v672 = vlaneseq
        %v673 = vshrl.u32 %v672, 7
        %v674 = vsub.s32 %v671, %v673
        %v675 = vrot.slane %v665, %v674
        %v677 = vunpack.c.l.s4 1966171168
        %v678 = vunpack.c.0.s8 %v677
        %v679 = vlaneseq
        %v680 = vshrl.u32 %v679, 7
        %v681 = vsub.s32 %v678, %v680
        %v682 = vrot.slane %v666, %v681
        %v684 = vunpack.c.l.s4 1966171168
        %v685 = vunpack.c.0.s8 %v684
        %v686 = vlaneseq
        %v687 = vshrl.u32 %v686, 7
        %v688 = vsub.s32 %v685, %v687
        %v689 = vrot.slane %v667, %v688
        %v691 = vunpack.c.l.s4 1966171168
        %v692 = vunpack.c.0.s8 %v691
        %v693 = vlaneseq
        %v694 = vshrl.u32 %v693, 7
        %v695 = vsub.s32 %v692, %v694
        %v696 = vrot.slane %v668, %v695
        %v697 = vcombine.low %v675, %v682
        %v698 = vcombine.low %v689, %v696
        %v700 = vunpack.c.l.s4 1966171168
        %v701 = vunpack.c.0.s8 %v700
        %v702 = vlaneseq
        %v703 = vshrl.u32 %v702, 7
        %v704 = vsub.s32 %v701, %v703
        %v705 = vrot.slane %v697, %v704
        %v707 = vunpack.c.l.s4 1966171168
        %v708 = vunpack.c.0.s8 %v707
        %v709 = vlaneseq
        %v710 = vshrl.u32 %v709, 7
        %v711 = vsub.s32 %v708, %v710
        %v712 = vrot.slane %v698, %v711
        %v713 = vcombine.low %v705, %v712
        %v714 = vcombine.low %v463, %v471
        %v715 = vcombine.low %v479, %v487
        %v716 = vcombine.low %v495, %v503
        %v717 = vcombine.low %v511, %v519
        %v719 = vunpack.c.l.s4 1966171168
        %v720 = vunpack.c.0.s8 %v719
        %v721 = vlaneseq
        %v722 = vshrl.u32 %v721, 7
        %v723 = vsub.s32 %v720, %v722
        %v724 = vrot.slane %v714, %v723
        %v726 = vunpack.c.l.s4 1966171168
        %v727 = vunpack.c.0.s8 %v726
        %v728 = vlaneseq
        %v729 = vshrl.u32 %v728, 7
        %v730 = vsub.s32 %v727, %v729
        %v731 = vrot.slane %v715, %v730
        %v733 = vunpack.c.l.s4 1966171168
        %v734 = vunpack.c.0.s8 %v733
        %v735 = vlaneseq
        %v736 = vshrl.u32 %v735, 7
        %v737 = vsub.s32 %v734, %v736
        %v738 = vrot.slane %v716, %v737
        %v740 = vunpack.c.l.s4 1966171168
        %v741 = vunpack.c.0.s8 %v740
        %v742 = vlaneseq
        %v743 = vshrl.u32 %v742, 7
        %v744 = vsub.s32 %v741, %v743
        %v745 = vrot.slane %v717, %v744
        %v746 = vcombine.low %v724, %v731
        %v747 = vcombine.low %v738, %v745
        %v749 = vunpack.c.l.s4 1966171168
        %v750 = vunpack.c.0.s8 %v749
        %v751 = vlaneseq
        %v752 = vshrl.u32 %v751, 7
        %v753 = vsub.s32 %v750, %v752
        %v754 = vrot.slane %v746, %v753
        %v756 = vunpack.c.l.s4 1966171168
        %v757 = vunpack.c.0.s8 %v756
        %v758 = vlaneseq
        %v759 = vshrl.u32 %v758, 7
        %v760 = vsub.s32 %v757, %v759
        %v761 = vrot.slane %v747, %v760
        %v762 = vcombine.low %v754, %v761
        %v763 = vcombine.low %v527, %v535
        %v764 = vcombine.low %v543, %v551
        %v765 = vcombine.low %v559, %v567
        %v766 = vcombine.low %v575, %v583
        %v768 = vunpack.c.l.s4 1966171168
        %v769 = vunpack.c.0.s8 %v768
        %v770 = vlaneseq
        %v771 = vshrl.u32 %v770, 7
        %v772 = vsub.s32 %v769, %v771
        %v773 = vrot.slane %v763, %v772
        %v775 = vunpack.c.l.s4 1966171168
        %v776 = vunpack.c.0.s8 %v775
        %v777 = vlaneseq
        %v778 = vshrl.u32 %v777, 7
        %v779 = vsub.s32 %v776, %v778
        %v780 = vrot.slane %v764, %v779
        %v782 = vunpack.c.l.s4 1966171168
        %v783 = vunpack.c.0.s8 %v782
        %v784 = vlaneseq
        %v785 = vshrl.u32 %v784, 7
        %v786 = vsub.s32 %v783, %v785
        %v787 = vrot.slane %v765, %v786
        %v789 = vunpack.c.l.s4 1966171168
        %v790 = vunpack.c.0.s8 %v789
        %v791 = vlaneseq
        %v792 = vshrl.u32 %v791, 7
        %v793 = vsub.s32 %v790, %v792
        %v794 = vrot.slane %v766, %v793
        %v795 = vcombine.low %v773, %v780
        %v796 = vcombine.low %v787, %v794
        %v798 = vunpack.c.l.s4 1966171168
        %v799 = vunpack.c.0.s8 %v798
        %v800 = vlaneseq
        %v801 = vshrl.u32 %v800, 7
        %v802 = vsub.s32 %v799, %v801
        %v803 = vrot.slane %v795, %v802
        %v805 = vunpack.c.l.s4 1966171168
        %v806 = vunpack.c.0.s8 %v805
        %v807 = vlaneseq
        %v808 = vshrl.u32 %v807, 7
        %v809 = vsub.s32 %v806, %v808
        %v810 = vrot.slane %v796, %v809
        %v811 = vcombine.low %v803, %v810
        %816 = vst [vmem:[%s261] sm:$0xff] %v664
        %817 = vst [vmem:[%s261 + $0x8] sm:$0xff] %v713
        %818 = vst [vmem:[%s261 + $0x10] sm:$0xff] %v762
        %819 = vst [vmem:[%s261 + $0x18] sm:$0xff] %v811
        %s820 = smul.u32 32, %s12
        %p821 = scmp.lt.s32.totalorder %s820, 63
        %s822 = scalar_select %p821, %s820, 63
        %s823 = scalar_lea.vmem %s1, %s822
        // Predicated region
        $region48: #{stem_forward.3} parent=42 // pred_check
          %p824 = pneg %p56
        $region49: #{stem_forward.3} parent=42 // pred_check_branch
          %826 = sbr.rel (%p824) target = $region51
        $region50: #{stem_forward.3} parent=42 // pred_region
          %s827 = smul.u32 32, %s12
        $region51: #{stem_forward.3} parent=42 // pred_fallthru
          _
      $region43: #{stem_forward.3} parent=5 // pred_fallthru
        _
      %p828 = scmp.le.s32.totalorder 2, %s7
      // Predicated region
      $region52: #{stem_forward.3} parent=5 // pred_check
        %p829 = pneg %p828
      $region53: #{stem_forward.3} parent=5 // pred_check_branch
        %831 = sbr.rel (%p829) target = $region55
      $region54: #{stem_forward.3} parent=5 // pred_region
        %s832 = ssub.s32 %s7, 2
        // Predicated region
        $region56: #{stem_forward.3} parent=54 // pred_check
          %p833 = pneg %p62
        $region57: #{stem_forward.3} parent=54 // pred_check_branch
          %835 = sbr.rel (%p833) target = $region59
        $region58: #{stem_forward.3} parent=54 // pred_region
          %s836 = smul.u32 32, %s13
          %p837 = scmp.lt.s32.totalorder %s836, 63
          %s838 = scalar_select %p837, %s836, 63
          %s839 = scalar_lea.vmem %s1, %s838
        $region59: #{stem_forward.3} parent=54 // pred_fallthru
          _
      $region55: #{stem_forward.3} parent=5 // pred_fallthru
        _
    $region6: #{stem_forward.3} parent=1 // loop_footer
      %s11 = sadd.s32 1, %s7
    $region7: #{stem_forward.3} parent=1 // loop_footer_branch
      %6 = sbr.rel target = $region3
    $region8: #{stem_forward.3} parent=1 // loop_exit
      _

// kernel: stem_forward.2
$region0: #{stem_forward.2}
  #allocation0 [shape = 'u32[]', space=smem, size = 0x4, offset = 0x4, fixed_abs, tag = 'smem constant byte address 0x4 - core index']
  #allocation1 [shape = 'u32[144,128]{1,0:T(1,128)}', space=vmem, size = 0x12000, scoped, tag = 'internal scratch']
  %s0 = inlined_call_operand.vmem [shape: bf16[1,512,256], index: 0, kind: input, shape index: {}]
  %s1 = inlined_call_operand.vmem [shape: bf16[1,256,128], index: 1, kind: input, shape index: {}]
  %s2 = inlined_call_operand.vmem [shape: f32[1,1,128], index: 2, kind: input, shape index: {}]
  %s3 = inlined_call_operand.vmem [shape: f32[1,512,128], index: 3, kind: output, shape index: {}]
  %s4 = sld [smem:[#allocation0]]
  $region53: #{stem_forward.2} parent=0
    _
  %s6 = ssub.s32 1, %s4
  %s7 = scalar_select 0, %s6, %s4
  loop: start=0, step=1, limit=4
  $region2: #{stem_forward.2} parent=0 // loop_pre_header
    _
  $region3: #{stem_forward.2} parent=0 // loop_header
    %s9 = sphi 0, %s13
    %p10 = scmp.ge.s32.totalorder %s9, 4
    %s16 = sphi 0, %s42
    %s17 = sphi 0, %s38
    %s18 = sphi 0, %s34
    %s19 = sphi 0, %s30
    %s20 = sphi 0, %s16
    %s21 = sphi 0, %s17
    %s22 = sphi 0, %s18
    %s23 = sphi 0, %s19
    %s24 = sphi 0, %s20
    %s25 = sphi 0, %s21
    %s26 = sphi 0, %s22
    %s27 = sphi 0, %s23
    %s49 = sphi 0, %s51
    %s52 = sphi 0, %s49
    %s53 = sphi 0, %s52
    %s69 = sphi 0, %s53
    %s79 = sphi 0, %s81
    %s82 = sphi 0, %s79
    %s83 = sphi 0, %s82
    %s99 = sphi 0, %s83
    %s107 = sphi 0, %s109
    %s110 = sphi 0, %s107
    %s111 = sphi 0, %s110
    %s127 = sphi 0, %s111
    %s137 = sphi 0, %s139
    %s140 = sphi 0, %s137
    %s141 = sphi 0, %s140
    %s157 = sphi 0, %s141
  $region4: #{stem_forward.2} parent=0 // loop_header_branch
    %12 = sbr.rel (%p10) target = $region8
  $region5: #{stem_forward.2} parent=0 // loop_body
    %s14 = ssub.s32 %s9, 1
    %s15 = ssub.s32 %s9, 2
    %s28 = sadd.s32 1, %s19
    %p29 = scmp.ge.s32.totalorder %s28, 1
    %s30 = scalar_select %p29, 0, %s28
    %s31 = sadd.s32 1, %s18
    %s32 = scalar_select %p29, %s31, %s18
    %p33 = scmp.ge.s32.totalorder %s32, 1
    %s34 = scalar_select %p33, 0, %s32
    %s35 = sadd.s32 1, %s17
    %s36 = scalar_select %p33, %s35, %s17
    %p37 = scmp.ge.s32.totalorder %s36, 2
    %s38 = scalar_select %p37, 0, %s36
    %s39 = sadd.s32 1, %s16
    %s40 = scalar_select %p37, %s39, %s16
    %p41 = scmp.ge.s32.totalorder %s40, 1
    %s42 = scalar_select %p41, 0, %s40
    %s43 = ssub.s32 %s16, %s42
    %s44 = ssub.s32 %s17, %s38
    %s45 = sor.u32 %s43, %s44
    %s46 = ssub.s32 %s19, %s30
    %s47 = sor.u32 %s45, %s46
    %p48 = scmp.eq.s32.totalorder %s47, 0
    %s50 = sadd.s32 %s49, 1
    %s51 = scalar_select %p48, %s49, %s50
    %p54 = pneg %p48
    %p55 = scmp.eq.s32.totalorder %s9, 1
    %p56 = por %p54, %p55
    %p57 = scmp.ne.s32.totalorder %s49, %s52
    %p58 = scmp.eq.s32.totalorder %s9, 0
    %p59 = por %p57, %p58
    %p60 = scmp.ne.s32.totalorder %s49, %s52
    %p61 = scmp.eq.s32.totalorder %s14, 1
    %p62 = por %p60, %p61
    %p63 = scmp.ne.s32.totalorder %s52, %s53
    %p64 = scmp.eq.s32.totalorder %s14, 0
    %p65 = por %p63, %p64
    %p66 = scmp.ne.s32.totalorder %s52, %s53
    %p67 = scmp.eq.s32.totalorder %s15, 1
    %p68 = por %p66, %p67
    %p70 = scmp.ne.s32.totalorder %s53, %s69
    %p71 = scmp.eq.s32.totalorder %s15, 0
    %p72 = por %p70, %p71
    %s73 = ssub.s32 %s16, %s42
    %s74 = ssub.s32 %s19, %s30
    %s75 = sor.u32 %s73, %s74
    %s76 = ssub.s32 %s18, %s34
    %s77 = sor.u32 %s75, %s76
    %p78 = scmp.eq.s32.totalorder %s77, 0
    %s80 = sadd.s32 %s79, 1
    %s81 = scalar_select %p78, %s79, %s80
    %p84 = pneg %p78
    %p85 = scmp.eq.s32.totalorder %s9, 1
    %p86 = por %p84, %p85
    %p87 = scmp.ne.s32.totalorder %s79, %s82
    %p88 = scmp.eq.s32.totalorder %s9, 0
    %p89 = por %p87, %p88
    %p90 = scmp.ne.s32.totalorder %s79, %s82
    %p91 = scmp.eq.s32.totalorder %s14, 1
    %p92 = por %p90, %p91
    %p93 = scmp.ne.s32.totalorder %s82, %s83
    %p94 = scmp.eq.s32.totalorder %s14, 0
    %p95 = por %p93, %p94
    %p96 = scmp.ne.s32.totalorder %s82, %s83
    %p97 = scmp.eq.s32.totalorder %s15, 1
    %p98 = por %p96, %p97
    %p100 = scmp.ne.s32.totalorder %s83, %s99
    %p101 = scmp.eq.s32.totalorder %s15, 0
    %p102 = por %p100, %p101
    %s103 = ssub.s32 %s16, %s42
    %s104 = ssub.s32 %s18, %s34
    %s105 = sor.u32 %s103, %s104
    %p106 = scmp.eq.s32.totalorder %s105, 0
    %s108 = sadd.s32 %s107, 1
    %s109 = scalar_select %p106, %s107, %s108
    %p112 = pneg %p106
    %p113 = scmp.eq.s32.totalorder %s9, 1
    %p114 = por %p112, %p113
    %p115 = scmp.ne.s32.totalorder %s107, %s110
    %p116 = scmp.eq.s32.totalorder %s9, 0
    %p117 = por %p115, %p116
    %p118 = scmp.ne.s32.totalorder %s107, %s110
    %p119 = scmp.eq.s32.totalorder %s14, 1
    %p120 = por %p118, %p119
    %p121 = scmp.ne.s32.totalorder %s110, %s111
    %p122 = scmp.eq.s32.totalorder %s14, 0
    %p123 = por %p121, %p122
    %p124 = scmp.ne.s32.totalorder %s110, %s111
    %p125 = scmp.eq.s32.totalorder %s15, 1
    %p126 = por %p124, %p125
    %p128 = scmp.ne.s32.totalorder %s111, %s127
    %p129 = scmp.eq.s32.totalorder %s15, 0
    %p130 = por %p128, %p129
    %s131 = ssub.s32 %s16, %s42
    %s132 = ssub.s32 %s17, %s38
    %s133 = sor.u32 %s131, %s132
    %s134 = ssub.s32 %s18, %s34
    %s135 = sor.u32 %s133, %s134
    %p136 = scmp.eq.s32.totalorder %s135, 0
    %s138 = sadd.s32 %s137, 1
    %s139 = scalar_select %p136, %s137, %s138
    %p142 = pneg %p136
    %p143 = scmp.eq.s32.totalorder %s9, 1
    %p144 = por %p142, %p143
    %p145 = scmp.ne.s32.totalorder %s137, %s140
    %p146 = scmp.eq.s32.totalorder %s9, 0
    %p147 = por %p145, %p146
    %p148 = scmp.ne.s32.totalorder %s137, %s140
    %p149 = scmp.eq.s32.totalorder %s14, 1
    %p150 = por %p148, %p149
    %p151 = scmp.ne.s32.totalorder %s140, %s141
    %p152 = scmp.eq.s32.totalorder %s14, 0
    %p153 = por %p151, %p152
    %p154 = scmp.ne.s32.totalorder %s140, %s141
    %p155 = scmp.eq.s32.totalorder %s15, 1
    %p156 = por %p154, %p155
    %p158 = scmp.ne.s32.totalorder %s141, %s157
    %p159 = scmp.eq.s32.totalorder %s15, 0
    %p160 = por %p158, %p159
    %p161 = scmp.le.s32.totalorder 1, %s9
    %p162 = scmp.lt.s32.totalorder %s9, 3
    %p163 = pnand %p161, %p162
    %p164 = pneg %p163
    // Predicated region
    $region9: #{stem_forward.2} parent=5 // pred_check
      _
    $region10: #{stem_forward.2} parent=5 // pred_check_branch
      %166 = sbr.rel (%p163) target = $region12
    $region11: #{stem_forward.2} parent=5 // pred_region
      %s167 = ssub.s32 %s9, 1
      // Predicated region
      $region13: #{stem_forward.2} parent=11 // pred_check
        %p168 = pneg %p95
      $region14: #{stem_forward.2} parent=11 // pred_check_branch
        %170 = sbr.rel (%p168) target = $region16
      $region15: #{stem_forward.2} parent=11 // pred_region
        %s171 = smul.u32 32, %s23
        %p172 = scmp.lt.s32.totalorder %s20, 0
        %s173 = scalar_select %p172, %s20, 0
        %p174 = scmp.lt.s32.totalorder %s171, 31
        %s175 = scalar_select %p174, %s171, 31
        %p176 = scmp.lt.s32.totalorder %s22, 0
        %s177 = scalar_select %p176, %s22, 0
        %s178 = sadd.s32 %s177, %s175
        %s179 = smul.addr %s173, 32
        %s180 = sadd.s32 %s178, %s179
        %s181 = smul.addr %s180, 4
        %s182 = scalar_lea.vmem %s1, %s181
        %s183 = smul.u32 32, %s23
      $region16: #{stem_forward.2} parent=11 // pred_fallthru
        _
      // Predicated region
      $region17: #{stem_forward.2} parent=11 // pred_check
        %p184 = pneg %p123
      $region18: #{stem_forward.2} parent=11 // pred_check_branch
        %186 = sbr.rel (%p184) target = $region20
      $region19: #{stem_forward.2} parent=11 // pred_region
        %p187 = scmp.lt.s32.totalorder %s20, 0
        %s188 = scalar_select %p187, %s20, 0
        %p189 = scmp.lt.s32.totalorder %s22, 0
        %s190 = scalar_select %p189, %s22, 0
        %s191 = sadd.s32 %s190, %s188
        %s192 = scalar_lea.vmem %s2, %s191
      $region20: #{stem_forward.2} parent=11 // pred_fallthru
        _
    $region12: #{stem_forward.2} parent=5 // pred_fallthru
      _
    %p193 = scmp.lt.s32.totalorder %s9, 2
    // Predicated region
    $region21: #{stem_forward.2} parent=5 // pred_check
      %p194 = pneg %p193
    $region22: #{stem_forward.2} parent=5 // pred_check_branch
      %196 = sbr.rel (%p194) target = $region24
    $region23: #{stem_forward.2} parent=5 // pred_region
      // Predicated region
      $region25: #{stem_forward.2} parent=23 // pred_check
        %p197 = pneg %p59
      $region26: #{stem_forward.2} parent=23 // pred_check_branch
        %199 = sbr.rel (%p197) target = $region28
      $region27: #{stem_forward.2} parent=23 // pred_region
        %s200 = smul.u32 32, %s17
        %s201 = smul.u32 2, %s19
        %p202 = scmp.lt.s32.totalorder %s16, 0
        %s203 = scalar_select %p202, %s16, 0
        %p204 = scmp.lt.s32.totalorder %s200, 63
        %s205 = scalar_select %p204, %s200, 63
        %p206 = scmp.lt.s32.totalorder %s201, 1
        %s207 = scalar_select %p206, %s201, 1
        %s208 = smul.addr %s205, 2
        %s209 = sadd.s32 %s207, %s208
        %s210 = smul.addr %s203, 128
        %s211 = sadd.s32 %s209, %s210
        %s212 = smul.addr %s211, 4
        %s213 = scalar_lea.vmem %s0, %s212
        %s214 = smul.u32 32, %s17
        %s215 = smul.u32 2, %s19
      $region28: #{stem_forward.2} parent=23 // pred_fallthru
        _
    $region24: #{stem_forward.2} parent=5 // pred_fallthru
      _
    %p216 = scmp.le.s32.totalorder 1, %s9
    %p217 = scmp.lt.s32.totalorder %s9, 3
    %p218 = pnand %p216, %p217
    %p219 = pneg %p218
    // Predicated region
    $region29: #{stem_forward.2} parent=5 // pred_check
      _
    $region30: #{stem_forward.2} parent=5 // pred_check_branch
      %221 = sbr.rel (%p218) target = $region32
    $region31: #{stem_forward.2} parent=5 // pred_region
      %s222 = ssub.s32 %s9, 1
      %s223 = smul.u32 32, %s21
      %s224 = smul.u32 2, %s23
      %p225 = scmp.lt.s32.totalorder %s20, 0
      %s226 = scalar_select %p225, %s20, 0
      %p227 = scmp.lt.s32.totalorder %s223, 63
      %s228 = scalar_select %p227, %s223, 63
      %p229 = scmp.lt.s32.totalorder %s224, 1
      %s230 = scalar_select %p229, %s224, 1
      %s231 = smul.addr %s228, 2
      %s232 = sadd.s32 %s230, %s231
      %s233 = smul.addr %s226, 128
      %s234 = sadd.s32 %s232, %s233
      %s235 = smul.addr %s234, 4
      %s236 = scalar_lea.vmem %s0, %s235
      %p237 = pneg %p65
      %p238 = pneg %p62
      %s239 = smul.u32 32, %s23
      %p240 = scmp.lt.s32.totalorder %s20, 0
      %s241 = scalar_select %p240, %s20, 0
      %p242 = scmp.lt.s32.totalorder %s239, 31
      %s243 = scalar_select %p242, %s239, 31
      %p244 = scmp.lt.s32.totalorder %s22, 0
      %s245 = scalar_select %p244, %s22, 0
      %s246 = sadd.s32 %s245, %s243
      %s247 = smul.addr %s241, 32
      %s248 = sadd.s32 %s246, %s247
      %s249 = smul.addr %s248, 4
      %s250 = scalar_lea.vmem %s1, %s249
      %p251 = pneg %p95
      %p252 = pneg %p92
      %p253 = scmp.lt.s32.totalorder %s20, 0
      %s254 = scalar_select %p253, %s20, 0
      %p255 = scmp.lt.s32.totalorder %s22, 0
      %s256 = scalar_select %p255, %s22, 0
      %s257 = sadd.s32 %s256, %s254
      %s258 = scalar_lea.vmem %s2, %s257
      %p259 = pneg %p123
      %p260 = pneg %p120
      %p261 = pneg %p153
      %p262 = pneg %p150
      %s263 = smul.u32 32, %s21
      %p264 = scmp.lt.s32.totalorder %s20, 0
      %s265 = scalar_select %p264, %s20, 0
      %p266 = scmp.lt.s32.totalorder %s263, 63
      %s267 = scalar_select %p266, %s263, 63
      %p268 = scmp.lt.s32.totalorder %s22, 0
      %s269 = scalar_select %p268, %s22, 0
      %s270 = sadd.s32 %s269, %s267
      %s271 = smul.addr %s265, 64
      %s272 = sadd.s32 %s270, %s271
      %s273 = smul.addr %s272, 8
      %s274 = scalar_lea.vmem %s3, %s273
      %s275 = smul.u32 32, %s21
      %s276 = smul.u32 2, %s23
      %p277 = scmp.lt.s32.totalorder %s20, 0
      %s278 = scalar_select %p277, %s20, 0
      %p279 = scmp.lt.s32.totalorder %s275, 63
      %s280 = scalar_select %p279, %s275, 63
      %p281 = scmp.lt.s32.totalorder %s276, 1
      %s282 = scalar_select %p281, %s276, 1
      %s283 = smul.addr %s280, 2
      %s284 = sadd.s32 %s282, %s283
      %s285 = smul.addr %s278, 128
      %s286 = sadd.s32 %s284, %s285
      %s287 = smul.addr %s286, 4
      %s288 = scalar_lea.vmem %s0, %s287
      %s289 = smul.u32 32, %s21
      %s290 = smul.u32 2, %s23
      %s291 = smul.u32 32, %s23
      %p292 = scmp.lt.s32.totalorder %s20, 0
      %s293 = scalar_select %p292, %s20, 0
      %p294 = scmp.lt.s32.totalorder %s291, 31
      %s295 = scalar_select %p294, %s291, 31
      %p296 = scmp.lt.s32.totalorder %s22, 0
      %s297 = scalar_select %p296, %s22, 0
      %s298 = sadd.s32 %s297, %s295
      %s299 = smul.addr %s293, 32
      %s300 = sadd.s32 %s298, %s299
      %s301 = smul.addr %s300, 4
      %s302 = scalar_lea.vmem %s1, %s301
      %s303 = smul.u32 32, %s23
      %p304 = scmp.lt.s32.totalorder %s20, 0
      %s305 = scalar_select %p304, %s20, 0
      %p306 = scmp.lt.s32.totalorder %s22, 0
      %s307 = scalar_select %p306, %s22, 0
      %s308 = sadd.s32 %s307, %s305
      %s309 = scalar_lea.vmem %s2, %s308
      %s310 = smul.u32 32, %s21
      %p311 = scmp.lt.s32.totalorder %s20, 0
      %s312 = scalar_select %p311, %s20, 0
      %p313 = scmp.lt.s32.totalorder %s310, 63
      %s314 = scalar_select %p313, %s310, 63
      %p315 = scmp.lt.s32.totalorder %s22, 0
      %s316 = scalar_select %p315, %s22, 0
      %s317 = sadd.s32 %s316, %s314
      %s318 = smul.addr %s312, 64
      %s319 = sadd.s32 %s317, %s318
      %s320 = smul.addr %s319, 8
      %s321 = scalar_lea.vmem %s3, %s320
      %s322 = smul.u32 32, %s21
      %p324 = scmp.eq.s32.totalorder %s23, 0
      // Predicated region
      $region33: #{stem_forward.2} parent=31 // pred_check
        %p325 = pneg %p324
      $region34: #{stem_forward.2} parent=31 // pred_check_branch
        %327 = sbr.rel (%p325) target = $region36
      $region35: #{stem_forward.2} parent=31 // pred_region
        %328 = vst [vmem:[%s321] sm:$0xff] 0.0
        %329 = vst [vmem:[%s321 + $0x8] sm:$0xff] 0.0
        %330 = vst [vmem:[%s321 + $0x10] sm:$0xff] 0.0
        %331 = vst [vmem:[%s321 + $0x18] sm:$0xff] 0.0
        %332 = vst [vmem:[%s321 + $0x20] sm:$0xff] 0.0
        %333 = vst [vmem:[%s321 + $0x28] sm:$0xff] 0.0
        %334 = vst [vmem:[%s321 + $0x30] sm:$0xff] 0.0
        %335 = vst [vmem:[%s321 + $0x38] sm:$0xff] 0.0
        %336 = vst [vmem:[%s321 + $0x40] sm:$0xff] 0.0
        %337 = vst [vmem:[%s321 + $0x48] sm:$0xff] 0.0
        %338 = vst [vmem:[%s321 + $0x50] sm:$0xff] 0.0
        %339 = vst [vmem:[%s321 + $0x58] sm:$0xff] 0.0
        %340 = vst [vmem:[%s321 + $0x60] sm:$0xff] 0.0
        %341 = vst [vmem:[%s321 + $0x68] sm:$0xff] 0.0
        %342 = vst [vmem:[%s321 + $0x70] sm:$0xff] 0.0
        %343 = vst [vmem:[%s321 + $0x78] sm:$0xff] 0.0
        %344 = vst [vmem:[%s321 + $0x80] sm:$0xff] 0.0
        %345 = vst [vmem:[%s321 + $0x88] sm:$0xff] 0.0
        %346 = vst [vmem:[%s321 + $0x90] sm:$0xff] 0.0
        %347 = vst [vmem:[%s321 + $0x98] sm:$0xff] 0.0
        %348 = vst [vmem:[%s321 + $0xa0] sm:$0xff] 0.0
        %349 = vst [vmem:[%s321 + $0xa8] sm:$0xff] 0.0
        %350 = vst [vmem:[%s321 + $0xb0] sm:$0xff] 0.0
        %351 = vst [vmem:[%s321 + $0xb8] sm:$0xff] 0.0
        %352 = vst [vmem:[%s321 + $0xc0] sm:$0xff] 0.0
        %353 = vst [vmem:[%s321 + $0xc8] sm:$0xff] 0.0
        %354 = vst [vmem:[%s321 + $0xd0] sm:$0xff] 0.0
        %355 = vst [vmem:[%s321 + $0xd8] sm:$0xff] 0.0
        %356 = vst [vmem:[%s321 + $0xe0] sm:$0xff] 0.0
        %357 = vst [vmem:[%s321 + $0xe8] sm:$0xff] 0.0
        %358 = vst [vmem:[%s321 + $0xf0] sm:$0xff] 0.0
        %359 = vst [vmem:[%s321 + $0xf8] sm:$0xff] 0.0
      $region36: #{stem_forward.2} parent=31 // pred_fallthru
        _
      %v360 = vld [vmem:[%s321] sm:$0xff]
      %v361 = vld [vmem:[%s321 + $0x8] sm:$0xff]
      %v362 = vld [vmem:[%s321 + $0x10] sm:$0xff]
      %v363 = vld [vmem:[%s321 + $0x18] sm:$0xff]
      %v364 = vld [vmem:[%s321 + $0x20] sm:$0xff]
      %v365 = vld [vmem:[%s321 + $0x28] sm:$0xff]
      %v366 = vld [vmem:[%s321 + $0x30] sm:$0xff]
      %v367 = vld [vmem:[%s321 + $0x38] sm:$0xff]
      %v368 = vld [vmem:[%s321 + $0x40] sm:$0xff]
      %v369 = vld [vmem:[%s321 + $0x48] sm:$0xff]
      %v370 = vld [vmem:[%s321 + $0x50] sm:$0xff]
      %v371 = vld [vmem:[%s321 + $0x58] sm:$0xff]
      %v372 = vld [vmem:[%s321 + $0x60] sm:$0xff]
      %v373 = vld [vmem:[%s321 + $0x68] sm:$0xff]
      %v374 = vld [vmem:[%s321 + $0x70] sm:$0xff]
      %v375 = vld [vmem:[%s321 + $0x78] sm:$0xff]
      %v376 = vld [vmem:[%s321 + $0x80] sm:$0xff]
      %v377 = vld [vmem:[%s321 + $0x88] sm:$0xff]
      %v378 = vld [vmem:[%s321 + $0x90] sm:$0xff]
      %v379 = vld [vmem:[%s321 + $0x98] sm:$0xff]
      %v380 = vld [vmem:[%s321 + $0xa0] sm:$0xff]
      %v381 = vld [vmem:[%s321 + $0xa8] sm:$0xff]
      %v382 = vld [vmem:[%s321 + $0xb0] sm:$0xff]
      %v383 = vld [vmem:[%s321 + $0xb8] sm:$0xff]
      %v384 = vld [vmem:[%s321 + $0xc0] sm:$0xff]
      %v385 = vld [vmem:[%s321 + $0xc8] sm:$0xff]
      %v386 = vld [vmem:[%s321 + $0xd0] sm:$0xff]
      %v387 = vld [vmem:[%s321 + $0xd8] sm:$0xff]
      %v388 = vld [vmem:[%s321 + $0xe0] sm:$0xff]
      %v389 = vld [vmem:[%s321 + $0xe8] sm:$0xff]
      %v390 = vld [vmem:[%s321 + $0xf0] sm:$0xff]
      %v391 = vld [vmem:[%s321 + $0xf8] sm:$0xff]
      %v392 = vld [vmem:[%s288] sm:$0xff]
      %v393 = vld [vmem:[%s288 + $0x8] sm:$0xff]
      %v394 = vld [vmem:[%s288 + $0x10] sm:$0xff]
      %v395 = vld [vmem:[%s288 + $0x18] sm:$0xff]
      %v396 = vld [vmem:[%s288 + $0x20] sm:$0xff]
      %v397 = vld [vmem:[%s288 + $0x28] sm:$0xff]
      %v398 = vld [vmem:[%s288 + $0x30] sm:$0xff]
      %v399 = vld [vmem:[%s288 + $0x38] sm:$0xff]
      %v400 = vld [vmem:[%s288 + $0x40] sm:$0xff]
      %v401 = vld [vmem:[%s288 + $0x48] sm:$0xff]
      %v402 = vld [vmem:[%s288 + $0x50] sm:$0xff]
      %v403 = vld [vmem:[%s288 + $0x58] sm:$0xff]
      %v404 = vld [vmem:[%s288 + $0x60] sm:$0xff]
      %v405 = vld [vmem:[%s288 + $0x68] sm:$0xff]
      %v406 = vld [vmem:[%s288 + $0x70] sm:$0xff]
      %v407 = vld [vmem:[%s288 + $0x78] sm:$0xff]
      %v408 = vld [vmem:[%s288 + $0x80] sm:$0xff]
      %v409 = vld [vmem:[%s288 + $0x88] sm:$0xff]
      %v410 = vld [vmem:[%s288 + $0x90] sm:$0xff]
      %v411 = vld [vmem:[%s288 + $0x98] sm:$0xff]
      %v412 = vld [vmem:[%s288 + $0xa0] sm:$0xff]
      %v413 = vld [vmem:[%s288 + $0xa8] sm:$0xff]
      %v414 = vld [vmem:[%s288 + $0xb0] sm:$0xff]
      %v415 = vld [vmem:[%s288 + $0xb8] sm:$0xff]
      %v416 = vld [vmem:[%s288 + $0xc0] sm:$0xff]
      %v417 = vld [vmem:[%s288 + $0xc8] sm:$0xff]
      %v418 = vld [vmem:[%s288 + $0xd0] sm:$0xff]
      %v419 = vld [vmem:[%s288 + $0xd8] sm:$0xff]
      %v420 = vld [vmem:[%s288 + $0xe0] sm:$0xff]
      %v421 = vld [vmem:[%s288 + $0xe8] sm:$0xff]
      %v422 = vld [vmem:[%s288 + $0xf0] sm:$0xff]
      %v423 = vld [vmem:[%s288 + $0xf8] sm:$0xff]
      %v424 = vld [vmem:[%s302] sm:$0xf]
      %v425 = vld [vmem:[%s302 + $0x4] sm:$0xf]
      %v426 = vld [vmem:[%s302 + $0x8] sm:$0xf]
      %v427 = vld [vmem:[%s302 + $0xc] sm:$0xf]
      %v428 = vld [vmem:[%s302 + $0x10] sm:$0xf]
      %v429 = vld [vmem:[%s302 + $0x14] sm:$0xf]
      %v430 = vld [vmem:[%s302 + $0x18] sm:$0xf]
      %v431 = vld [vmem:[%s302 + $0x1c] sm:$0xf]
      %v432 = vld [vmem:[%s302 + $0x20] sm:$0xf]
      %v433 = vld [vmem:[%s302 + $0x24] sm:$0xf]
      %v434 = vld [vmem:[%s302 + $0x28] sm:$0xf]
      %v435 = vld [vmem:[%s302 + $0x2c] sm:$0xf]
      %v436 = vld [vmem:[%s302 + $0x30] sm:$0xf]
      %v437 = vld [vmem:[%s302 + $0x34] sm:$0xf]
      %v438 = vld [vmem:[%s302 + $0x38] sm:$0xf]
      %v439 = vld [vmem:[%s302 + $0x3c] sm:$0xf]
      %v440 = vld [vmem:[%s302 + $0x40] sm:$0xf]
      %v441 = vld [vmem:[%s302 + $0x44] sm:$0xf]
      %v442 = vld [vmem:[%s302 + $0x48] sm:$0xf]
      %v443 = vld [vmem:[%s302 + $0x4c] sm:$0xf]
      %v444 = vld [vmem:[%s302 + $0x50] sm:$0xf]
      %v445 = vld [vmem:[%s302 + $0x54] sm:$0xf]
      %v446 = vld [vmem:[%s302 + $0x58] sm:$0xf]
      %v447 = vld [vmem:[%s302 + $0x5c] sm:$0xf]
      %v448 = vld [vmem:[%s302 + $0x60] sm:$0xf]
      %v449 = vld [vmem:[%s302 + $0x64] sm:$0xf]
      %v450 = vld [vmem:[%s302 + $0x68] sm:$0xf]
      %v451 = vld [vmem:[%s302 + $0x6c] sm:$0xf]
      %v452 = vld [vmem:[%s302 + $0x70] sm:$0xf]
      %v453 = vld [vmem:[%s302 + $0x74] sm:$0xf]
      %v454 = vld [vmem:[%s302 + $0x78] sm:$0xf]
      %v455 = vld [vmem:[%s302 + $0x7c] sm:$0xf]
      %v488 = vunpack.c.l.b16 %v392
      %v489 = vunpack.c.h.b16 %v392
      %v490 = vunpack.c.l.b16 %v393
      %v491 = vunpack.c.h.b16 %v393
      %v492 = vunpack.c.l.b16 %v394
      %v493 = vunpack.c.h.b16 %v394
      %v494 = vunpack.c.l.b16 %v395
      %v495 = vunpack.c.h.b16 %v395
      %v496 = vunpack.c.l.b16 %v396
      %v497 = vunpack.c.h.b16 %v396
      %v498 = vunpack.c.l.b16 %v397
      %v499 = vunpack.c.h.b16 %v397
      %v500 = vunpack.c.l.b16 %v398
      %v501 = vunpack.c.h.b16 %v398
      %v502 = vunpack.c.l.b16 %v399
      %v503 = vunpack.c.h.b16 %v399
      %v504 = vunpack.c.l.b16 %v400
      %v505 = vunpack.c.h.b16 %v400
      %v506 = vunpack.c.l.b16 %v401
      %v507 = vunpack.c.h.b16 %v401
      %v508 = vunpack.c.l.b16 %v402
      %v509 = vunpack.c.h.b16 %v402
      %v510 = vunpack.c.l.b16 %v403
      %v511 = vunpack.c.h.b16 %v403
      %v512 = vunpack.c.l.b16 %v404
      %v513 = vunpack.c.h.b16 %v404
      %v514 = vunpack.c.l.b16 %v405
      %v515 = vunpack.c.h.b16 %v405
      %v516 = vunpack.c.l.b16 %v406
      %v517 = vunpack.c.h.b16 %v406
      %v518 = vunpack.c.l.b16 %v407
      %v519 = vunpack.c.h.b16 %v407
      %v520 = vunpack.c.l.b16 %v408
      %v521 = vunpack.c.h.b16 %v408
      %v522 = vunpack.c.l.b16 %v409
      %v523 = vunpack.c.h.b16 %v409
      %v524 = vunpack.c.l.b16 %v410
      %v525 = vunpack.c.h.b16 %v410
      %v526 = vunpack.c.l.b16 %v411
      %v527 = vunpack.c.h.b16 %v411
      %v528 = vunpack.c.l.b16 %v412
      %v529 = vunpack.c.h.b16 %v412
      %v530 = vunpack.c.l.b16 %v413
      %v531 = vunpack.c.h.b16 %v413
      %v532 = vunpack.c.l.b16 %v414
      %v533 = vunpack.c.h.b16 %v414
      %v534 = vunpack.c.l.b16 %v415
      %v535 = vunpack.c.h.b16 %v415
      %v536 = vunpack.c.l.b16 %v416
      %v537 = vunpack.c.h.b16 %v416
      %v538 = vunpack.c.l.b16 %v417
      %v539 = vunpack.c.h.b16 %v417
      %v540 = vunpack.c.l.b16 %v418
      %v541 = vunpack.c.h.b16 %v418
      %v542 = vunpack.c.l.b16 %v419
      %v543 = vunpack.c.h.b16 %v419
      %v544 = vunpack.c.l.b16 %v420
      %v545 = vunpack.c.h.b16 %v420
      %v546 = vunpack.c.l.b16 %v421
      %v547 = vunpack.c.h.b16 %v421
      %v548 = vunpack.c.l.b16 %v422
      %v549 = vunpack.c.h.b16 %v422
      %v550 = vunpack.c.l.b16 %v423
      %v551 = vunpack.c.h.b16 %v423
      %v552 = vpack.c.b16 %v490, %v488
      %v553 = vpack.c.b16 %v491, %v489
      %v554 = vpack.c.b16 %v494, %v492
      %v555 = vpack.c.b16 %v495, %v493
      %v556 = vpack.c.b16 %v498, %v496
      %v557 = vpack.c.b16 %v499, %v497
      %v558 = vpack.c.b16 %v502, %v500
      %v559 = vpack.c.b16 %v503, %v501
      %v560 = vpack.c.b16 %v506, %v504
      %v561 = vpack.c.b16 %v507, %v505
      %v562 = vpack.c.b16 %v510, %v508
      %v563 = vpack.c.b16 %v511, %v509
      %v564 = vpack.c.b16 %v514, %v512
      %v565 = vpack.c.b16 %v515, %v513
      %v566 = vpack.c.b16 %v518, %v516
      %v567 = vpack.c.b16 %v519, %v517
      %v568 = vpack.c.b16 %v522, %v520
      %v569 = vpack.c.b16 %v523, %v521
      %v570 = vpack.c.b16 %v526, %v524
      %v571 = vpack.c.b16 %v527, %v525
      %v572 = vpack.c.b16 %v530, %v528
      %v573 = vpack.c.b16 %v531, %v529
      %v574 = vpack.c.b16 %v534, %v532
      %v575 = vpack.c.b16 %v535, %v533
      %v576 = vpack.c.b16 %v538, %v536
      %v577 = vpack.c.b16 %v539, %v537
      %v578 = vpack.c.b16 %v542, %v540
      %v579 = vpack.c.b16 %v543, %v541
      %v580 = vpack.c.b16 %v546, %v544
      %v581 = vpack.c.b16 %v547, %v545
      %v582 = vpack.c.b16 %v550, %v548
      %v583 = vpack.c.b16 %v551, %v549
      %v648 = vunpack.c.l.b16 %v424
      %v649 = vunpack.c.l.b16 %v425
      %v650 = vunpack.c.l.b16 %v426
      %v651 = vunpack.c.l.b16 %v427
      %v652 = vunpack.c.l.b16 %v428
      %v653 = vunpack.c.l.b16 %v429
      %v654 = vunpack.c.l.b16 %v430
      %v655 = vunpack.c.l.b16 %v431
      %v656 = vunpack.c.l.b16 %v432
      %v657 = vunpack.c.l.b16 %v433
      %v658 = vunpack.c.l.b16 %v434
      %v659 = vunpack.c.l.b16 %v435
      %v660 = vunpack.c.l.b16 %v436
      %v661 = vunpack.c.l.b16 %v437
      %v662 = vunpack.c.l.b16 %v438
      %v663 = vunpack.c.l.b16 %v439
      %v664 = vunpack.c.l.b16 %v440
      %v665 = vunpack.c.l.b16 %v441
      %v666 = vunpack.c.l.b16 %v442
      %v667 = vunpack.c.l.b16 %v443
      %v668 = vunpack.c.l.b16 %v444
      %v669 = vunpack.c.l.b16 %v445
      %v670 = vunpack.c.l.b16 %v446
      %v671 = vunpack.c.l.b16 %v447
      %v672 = vunpack.c.l.b16 %v448
      %v673 = vunpack.c.l.b16 %v449
      %v674 = vunpack.c.l.b16 %v450
      %v675 = vunpack.c.l.b16 %v451
      %v676 = vunpack.c.l.b16 %v452
      %v677 = vunpack.c.l.b16 %v453
      %v678 = vunpack.c.l.b16 %v454
      %v679 = vunpack.c.l.b16 %v455
      %v680 = vpack.c.b16 %v649, %v648
      %v681 = vpack.c.b16 %v651, %v650
      %v682 = vpack.c.b16 %v653, %v652
      %v683 = vpack.c.b16 %v655, %v654
      %v684 = vpack.c.b16 %v657, %v656
      %v685 = vpack.c.b16 %v659, %v658
      %v686 = vpack.c.b16 %v661, %v660
      %v687 = vpack.c.b16 %v663, %v662
      %v688 = vpack.c.b16 %v665, %v664
      %v689 = vpack.c.b16 %v667, %v666
      %v690 = vpack.c.b16 %v669, %v668
      %v691 = vpack.c.b16 %v671, %v670
      %v692 = vpack.c.b16 %v673, %v672
      %v693 = vpack.c.b16 %v675, %v674
      %v694 = vpack.c.b16 %v677, %v676
      %v695 = vpack.c.b16 %v679, %v678
      %712 = vmatprep.subr.bf16.mxu0 0
      %713 = vmatpush1.bf16.msra.mxu0 %v680
      %714 = vmatprep.subr.bf16.mxu0 0
      %715 = vmatpush1.bf16.msra.mxu0 %v681
      %716 = vmatprep.subr.bf16.mxu0 0
      %717 = vmatpush1.bf16.msra.mxu0 %v682
      %718 = vmatprep.subr.bf16.mxu0 0
      %719 = vmatpush1.bf16.msra.mxu0 %v683
      %720 = vmatprep.subr.bf16.mxu0 0
      %721 = vmatpush1.bf16.msra.mxu0 %v684
      %722 = vmatprep.subr.bf16.mxu0 0
      %723 = vmatpush1.bf16.msra.mxu0 %v685
      %724 = vmatprep.subr.bf16.mxu0 0
      %725 = vmatpush1.bf16.msra.mxu0 %v686
      %726 = vmatprep.subr.bf16.mxu0 0
      %727 = vmatpush1.bf16.msra.mxu0 %v687
      %728 = vmatprep.subr.bf16.mxu0 0
      %729 = vmatpush1.bf16.msra.mxu0 %v688
      %730 = vmatprep.subr.bf16.mxu0 0
      %731 = vmatpush1.bf16.msra.mxu0 %v689
      %732 = vmatprep.subr.bf16.mxu0 0
      %733 = vmatpush1.bf16.msra.mxu0 %v690
      %734 = vmatprep.subr.bf16.mxu0 0
      %735 = vmatpush1.bf16.msra.mxu0 %v691
      %736 = vmatprep.subr.bf16.mxu0 0
      %737 = vmatpush1.bf16.msra.mxu0 %v692
      %738 = vmatprep.subr.bf16.mxu0 0
      %739 = vmatpush1.bf16.msra.mxu0 %v693
      %740 = vmatprep.subr.bf16.mxu0 0
      %741 = vmatpush1.bf16.msra.mxu0 %v694
      %742 = vmatprep.subr.bf16.mxu0 0
      %743 = vmatpush1.bf16.msra.mxu0 %v695
      %744 = vmatprep.mubr.bf16.mxu0 %v553
      %745 = vmatmul.mubr.bf16.gmra.mrb[0].mxu0 %v552
      %v746 = vpop.f32.mrb[0].mxu0
      %v747 = vadd.f32 0.0, %v746
      %v748 = vpop.f32.mrb[0].mxu0
      %v749 = vpop.f32.mrb[0].mxu0
      %v750 = vadd.f32 0.0, %v749
      %v751 = vpop.f32.mrb[0].mxu0
      %752 = vmatprep.mubr.bf16.mxu0 %v555
      %753 = vmatmul.mubr.bf16.gmra.mrb[0].mxu0 %v554
      %v754 = vpop.f32.mrb[0].mxu0
      %v755 = vadd.f32 0.0, %v754
      %v756 = vpop.f32.mrb[0].mxu0
      %v757 = vpop.f32.mrb[0].mxu0
      %v758 = vadd.f32 0.0, %v757
      %v759 = vpop.f32.mrb[0].mxu0
      %760 = vmatprep.mubr.bf16.mxu0 %v557
      %761 = vmatmul.mubr.bf16.gmra.mrb[0].mxu0 %v556
      %v762 = vpop.f32.mrb[0].mxu0
      %v763 = vadd.f32 0.0, %v762
      %v764 = vpop.f32.mrb[0].mxu0
      %v765 = vpop.f32.mrb[0].mxu0
      %v766 = vadd.f32 0.0, %v765
      %v767 = vpop.f32.mrb[0].mxu0
      %768 = vmatprep.mubr.bf16.mxu0 %v559
      %769 = vmatmul.mubr.bf16.gmra.mrb[0].mxu0 %v558
      %v770 = vpop.f32.mrb[0].mxu0
      %v771 = vadd.f32 0.0, %v770
      %v772 = vpop.f32.mrb[0].mxu0
      %v773 = vpop.f32.mrb[0].mxu0
      %v774 = vadd.f32 0.0, %v773
      %v775 = vpop.f32.mrb[0].mxu0
      %776 = vmatprep.mubr.bf16.mxu0 %v561
      %777 = vmatmul.mubr.bf16.gmra.mrb[0].mxu0 %v560
      %v778 = vpop.f32.mrb[0].mxu0
      %v779 = vadd.f32 0.0, %v778
      %v780 = vpop.f32.mrb[0].mxu0
      %v781 = vpop.f32.mrb[0].mxu0
      %v782 = vadd.f32 0.0, %v781
      %v783 = vpop.f32.mrb[0].mxu0
      %784 = vmatprep.mubr.bf16.mxu0 %v563
      %785 = vmatmul.mubr.bf16.gmra.mrb[0].mxu0 %v562
      %v786 = vpop.f32.mrb[0].mxu0
      %v787 = vadd.f32 0.0, %v786
      %v788 = vpop.f32.mrb[0].mxu0
      %v789 = vpop.f32.mrb[0].mxu0
      %v790 = vadd.f32 0.0, %v789
      %v791 = vpop.f32.mrb[0].mxu0
      %792 = vmatprep.mubr.bf16.mxu0 %v565
      %793 = vmatmul.mubr.bf16.gmra.mrb[0].mxu0 %v564
      %v794 = vpop.f32.mrb[0].mxu0
      %v795 = vadd.f32 0.0, %v794
      %v796 = vpop.f32.mrb[0].mxu0
      %v797 = vpop.f32.mrb[0].mxu0
      %v798 = vadd.f32 0.0, %v797
      %v799 = vpop.f32.mrb[0].mxu0
      %800 = vmatprep.mubr.bf16.mxu0 %v567
      %801 = vmatmul.mubr.bf16.gmra.mrb[0].mxu0 %v566
      %v802 = vpop.f32.mrb[0].mxu0
      %v803 = vadd.f32 0.0, %v802
      %v804 = vpop.f32.mrb[0].mxu0
      %v805 = vpop.f32.mrb[0].mxu0
      %v806 = vadd.f32 0.0, %v805
      %v807 = vpop.f32.mrb[0].mxu0
      %808 = vmatprep.mubr.bf16.mxu0 %v569
      %809 = vmatmul.mubr.bf16.gmra.mrb[0].mxu0 %v568
      %v810 = vpop.f32.mrb[0].mxu0
      %v811 = vadd.f32 0.0, %v810
      %v812 = vpop.f32.mrb[0].mxu0
      %v813 = vpop.f32.mrb[0].mxu0
      %v814 = vadd.f32 0.0, %v813
      %v815 = vpop.f32.mrb[0].mxu0
      %816 = vmatprep.mubr.bf16.mxu0 %v571
      %817 = vmatmul.mubr.bf16.gmra.mrb[0].mxu0 %v570
      %v818 = vpop.f32.mrb[0].mxu0
      %v819 = vadd.f32 0.0, %v818
      %v820 = vpop.f32.mrb[0].mxu0
      %v821 = vpop.f32.mrb[0].mxu0
      %v822 = vadd.f32 0.0, %v821
      %v823 = vpop.f32.mrb[0].mxu0
      %824 = vmatprep.mubr.bf16.mxu0 %v573
      %825 = vmatmul.mubr.bf16.gmra.mrb[0].mxu0 %v572
      %v826 = vpop.f32.mrb[0].mxu0
      %v827 = vadd.f32 0.0, %v826
      %v828 = vpop.f32.mrb[0].mxu0
      %v829 = vpop.f32.mrb[0].mxu0
      %v830 = vadd.f32 0.0, %v829
      %v831 = vpop.f32.mrb[0].mxu0
      %832 = vmatprep.mubr.bf16.mxu0 %v575
      %833 = vmatmul.mubr.bf16.gmra.mrb[0].mxu0 %v574
      %v834 = vpop.f32.mrb[0].mxu0
      %v835 = vadd.f32 0.0, %v834
      %v836 = vpop.f32.mrb[0].mxu0
      %v837 = vpop.f32.mrb[0].mxu0
      %v838 = vadd.f32 0.0, %v837
      %v839 = vpop.f32.mrb[0].mxu0
      %840 = vmatprep.mubr.bf16.mxu0 %v577
      %841 = vmatmul.mubr.bf16.gmra.mrb[0].mxu0 %v576
      %v842 = vpop.f32.mrb[0].mxu0
      %v843 = vadd.f32 0.0, %v842
      %v844 = vpop.f32.mrb[0].mxu0
      %v845 = vpop.f32.mrb[0].mxu0
      %v846 = vadd.f32 0.0, %v845
      %v847 = vpop.f32.mrb[0].mxu0
      %848 = vmatprep.mubr.bf16.mxu0 %v579
      %849 = vmatmul.mubr.bf16.gmra.mrb[0].mxu0 %v578
      %v850 = vpop.f32.mrb[0].mxu0
      %v851 = vadd.f32 0.0, %v850
      %v852 = vpop.f32.mrb[0].mxu0
      %v853 = vpop.f32.mrb[0].mxu0
      %v854 = vadd.f32 0.0, %v853
      %v855 = vpop.f32.mrb[0].mxu0
      %856 = vmatprep.mubr.bf16.mxu0 %v581
      %857 = vmatmul.mubr.bf16.gmra.mrb[0].mxu0 %v580
      %v858 = vpop.f32.mrb[0].mxu0
      %v859 = vadd.f32 0.0, %v858
      %v860 = vpop.f32.mrb[0].mxu0
      %v861 = vpop.f32.mrb[0].mxu0
      %v862 = vadd.f32 0.0, %v861
      %v863 = vpop.f32.mrb[0].mxu0
      %864 = vmatprep.mubr.bf16.mxu0 %v583
      %865 = vmatmul.mubr.bf16.gmra.mrb[0].mxu0 %v582
      %v866 = vpop.f32.mrb[0].mxu0
      %v867 = vadd.f32 0.0, %v866
      %v868 = vpop.f32.mrb[0].mxu0
      %v869 = vpop.f32.mrb[0].mxu0
      %v870 = vadd.f32 0.0, %v869
      %v871 = vpop.f32.mrb[0].mxu0
      %872 = vdwg.mxu0
      %v873 = vadd.f32 %v360, %v747
      %v874 = vadd.f32 %v361, %v750
      %v875 = vadd.f32 %v362, %v755
      %v876 = vadd.f32 %v363, %v758
      %v877 = vadd.f32 %v364, %v763
      %v878 = vadd.f32 %v365, %v766
      %v879 = vadd.f32 %v366, %v771
      %v880 = vadd.f32 %v367, %v774
      %v881 = vadd.f32 %v368, %v779
      %v882 = vadd.f32 %v369, %v782
      %v883 = vadd.f32 %v370, %v787
      %v884 = vadd.f32 %v371, %v790
      %v885 = vadd.f32 %v372, %v795
      %v886 = vadd.f32 %v373, %v798
      %v887 = vadd.f32 %v374, %v803
      %v888 = vadd.f32 %v375, %v806
      %v889 = vadd.f32 %v376, %v811
      %v890 = vadd.f32 %v377, %v814
      %v891 = vadd.f32 %v378, %v819
      %v892 = vadd.f32 %v379, %v822
      %v893 = vadd.f32 %v380, %v827
      %v894 = vadd.f32 %v381, %v830
      %v895 = vadd.f32 %v382, %v835
      %v896 = vadd.f32 %v383, %v838
      %v897 = vadd.f32 %v384, %v843
      %v898 = vadd.f32 %v385, %v846
      %v899 = vadd.f32 %v386, %v851
      %v900 = vadd.f32 %v387, %v854
      %v901 = vadd.f32 %v388, %v859
      %v902 = vadd.f32 %v389, %v862
      %v903 = vadd.f32 %v390, %v867
      %v904 = vadd.f32 %v391, %v870
      %905 = vst [vmem:[%s321] sm:$0xff] %v873
      %906 = vst [vmem:[%s321 + $0x8] sm:$0xff] %v874
      %907 = vst [vmem:[%s321 + $0x10] sm:$0xff] %v875
      %908 = vst [vmem:[%s321 + $0x18] sm:$0xff] %v876
      %909 = vst [vmem:[%s321 + $0x20] sm:$0xff] %v877
      %910 = vst [vmem:[%s321 + $0x28] sm:$0xff] %v878
      %911 = vst [vmem:[%s321 + $0x30] sm:$0xff] %v879
      %912 = vst [vmem:[%s321 + $0x38] sm:$0xff] %v880
      %913 = vst [vmem:[%s321 + $0x40] sm:$0xff] %v881
      %914 = vst [vmem:[%s321 + $0x48] sm:$0xff] %v882
      %915 = vst [vmem:[%s321 + $0x50] sm:$0xff] %v883
      %916 = vst [vmem:[%s321 + $0x58] sm:$0xff] %v884
      %917 = vst [vmem:[%s321 + $0x60] sm:$0xff] %v885
      %918 = vst [vmem:[%s321 + $0x68] sm:$0xff] %v886
      %919 = vst [vmem:[%s321 + $0x70] sm:$0xff] %v887
      %920 = vst [vmem:[%s321 + $0x78] sm:$0xff] %v888
      %921 = vst [vmem:[%s321 + $0x80] sm:$0xff] %v889
      %922 = vst [vmem:[%s321 + $0x88] sm:$0xff] %v890
      %923 = vst [vmem:[%s321 + $0x90] sm:$0xff] %v891
      %924 = vst [vmem:[%s321 + $0x98] sm:$0xff] %v892
      %925 = vst [vmem:[%s321 + $0xa0] sm:$0xff] %v893
      %926 = vst [vmem:[%s321 + $0xa8] sm:$0xff] %v894
      %927 = vst [vmem:[%s321 + $0xb0] sm:$0xff] %v895
      %928 = vst [vmem:[%s321 + $0xb8] sm:$0xff] %v896
      %929 = vst [vmem:[%s321 + $0xc0] sm:$0xff] %v897
      %930 = vst [vmem:[%s321 + $0xc8] sm:$0xff] %v898
      %931 = vst [vmem:[%s321 + $0xd0] sm:$0xff] %v899
      %932 = vst [vmem:[%s321 + $0xd8] sm:$0xff] %v900
      %933 = vst [vmem:[%s321 + $0xe0] sm:$0xff] %v901
      %934 = vst [vmem:[%s321 + $0xe8] sm:$0xff] %v902
      %935 = vst [vmem:[%s321 + $0xf0] sm:$0xff] %v903
      %936 = vst [vmem:[%s321 + $0xf8] sm:$0xff] %v904
      // Predicated region
      $region37: #{stem_forward.2} parent=31 // pred_check
        %p937 = pneg %p324
      $region38: #{stem_forward.2} parent=31 // pred_check_branch
        %939 = sbr.rel (%p937) target = $region40
      $region39: #{stem_forward.2} parent=31 // pred_region
        %v940 = vld [vmem:[%s321] sm:$0xff]
        %v941 = vld [vmem:[%s321 + $0x8] sm:$0xff]
        %v942 = vld [vmem:[%s321 + $0x10] sm:$0xff]
        %v943 = vld [vmem:[%s321 + $0x18] sm:$0xff]
        %v944 = vld [vmem:[%s321 + $0x20] sm:$0xff]
        %v945 = vld [vmem:[%s321 + $0x28] sm:$0xff]
        %v946 = vld [vmem:[%s321 + $0x30] sm:$0xff]
        %v947 = vld [vmem:[%s321 + $0x38] sm:$0xff]
        %v948 = vld [vmem:[%s321 + $0x40] sm:$0xff]
        %v949 = vld [vmem:[%s321 + $0x48] sm:$0xff]
        %v950 = vld [vmem:[%s321 + $0x50] sm:$0xff]
        %v951 = vld [vmem:[%s321 + $0x58] sm:$0xff]
        %v952 = vld [vmem:[%s321 + $0x60] sm:$0xff]
        %v953 = vld [vmem:[%s321 + $0x68] sm:$0xff]
        %v954 = vld [vmem:[%s321 + $0x70] sm:$0xff]
        %v955 = vld [vmem:[%s321 + $0x78] sm:$0xff]
        %v956 = vld [vmem:[%s321 + $0x80] sm:$0xff]
        %v957 = vld [vmem:[%s321 + $0x88] sm:$0xff]
        %v958 = vld [vmem:[%s321 + $0x90] sm:$0xff]
        %v959 = vld [vmem:[%s321 + $0x98] sm:$0xff]
        %v960 = vld [vmem:[%s321 + $0xa0] sm:$0xff]
        %v961 = vld [vmem:[%s321 + $0xa8] sm:$0xff]
        %v962 = vld [vmem:[%s321 + $0xb0] sm:$0xff]
        %v963 = vld [vmem:[%s321 + $0xb8] sm:$0xff]
        %v964 = vld [vmem:[%s321 + $0xc0] sm:$0xff]
        %v965 = vld [vmem:[%s321 + $0xc8] sm:$0xff]
        %v966 = vld [vmem:[%s321 + $0xd0] sm:$0xff]
        %v967 = vld [vmem:[%s321 + $0xd8] sm:$0xff]
        %v968 = vld [vmem:[%s321 + $0xe0] sm:$0xff]
        %v969 = vld [vmem:[%s321 + $0xe8] sm:$0xff]
        %v970 = vld [vmem:[%s321 + $0xf0] sm:$0xff]
        %v971 = vld [vmem:[%s321 + $0xf8] sm:$0xff]
        %v972 = vld [vmem:[%s309] sm:$0x1]
        %v974 = vlaneseq
        %v975 = vshrl.u32 %v974, 7
        %v976 = vsub.s32 0, %v975
        %v977 = vrot.slane %v972, %v976
        %v979 = vadd.f32 %v940, %v977
        %v980 = vadd.f32 %v941, %v977
        %v981 = vadd.f32 %v942, %v977
        %v982 = vadd.f32 %v943, %v977
        %v983 = vadd.f32 %v944, %v977
        %v984 = vadd.f32 %v945, %v977
        %v985 = vadd.f32 %v946, %v977
        %v986 = vadd.f32 %v947, %v977
        %v987 = vadd.f32 %v948, %v977
        %v988 = vadd.f32 %v949, %v977
        %v989 = vadd.f32 %v950, %v977
        %v990 = vadd.f32 %v951, %v977
        %v991 = vadd.f32 %v952, %v977
        %v992 = vadd.f32 %v953, %v977
        %v993 = vadd.f32 %v954, %v977
        %v994 = vadd.f32 %v955, %v977
        %v995 = vadd.f32 %v956, %v977
        %v996 = vadd.f32 %v957, %v977
        %v997 = vadd.f32 %v958, %v977
        %v998 = vadd.f32 %v959, %v977
        %v999 = vadd.f32 %v960, %v977
        %v1000 = vadd.f32 %v961, %v977
        %v1001 = vadd.f32 %v962, %v977
        %v1002 = vadd.f32 %v963, %v977
        %v1003 = vadd.f32 %v964, %v977
        %v1004 = vadd.f32 %v965, %v977
        %v1005 = vadd.f32 %v966, %v977
        %v1006 = vadd.f32 %v967, %v977
        %v1007 = vadd.f32 %v968, %v977
        %v1008 = vadd.f32 %v969, %v977
        %v1009 = vadd.f32 %v970, %v977
        %v1010 = vadd.f32 %v971, %v977
        %v1011 = vmax.f32 %v979, 0.0
        %v1012 = vmax.f32 %v980, 0.0
        %v1013 = vmax.f32 %v981, 0.0
        %v1014 = vmax.f32 %v982, 0.0
        %v1015 = vmax.f32 %v983, 0.0
        %v1016 = vmax.f32 %v984, 0.0
        %v1017 = vmax.f32 %v985, 0.0
        %v1018 = vmax.f32 %v986, 0.0
        %v1019 = vmax.f32 %v987, 0.0
        %v1020 = vmax.f32 %v988, 0.0
        %v1021 = vmax.f32 %v989, 0.0
        %v1022 = vmax.f32 %v990, 0.0
        %v1023 = vmax.f32 %v991, 0.0
        %v1024 = vmax.f32 %v992, 0.0
        %v1025 = vmax.f32 %v993, 0.0
        %v1026 = vmax.f32 %v994, 0.0
        %v1027 = vmax.f32 %v995, 0.0
        %v1028 = vmax.f32 %v996, 0.0
        %v1029 = vmax.f32 %v997, 0.0
        %v1030 = vmax.f32 %v998, 0.0
        %v1031 = vmax.f32 %v999, 0.0
        %v1032 = vmax.f32 %v1000, 0.0
        %v1033 = vmax.f32 %v1001, 0.0
        %v1034 = vmax.f32 %v1002, 0.0
        %v1035 = vmax.f32 %v1003, 0.0
        %v1036 = vmax.f32 %v1004, 0.0
        %v1037 = vmax.f32 %v1005, 0.0
        %v1038 = vmax.f32 %v1006, 0.0
        %v1039 = vmax.f32 %v1007, 0.0
        %v1040 = vmax.f32 %v1008, 0.0
        %v1041 = vmax.f32 %v1009, 0.0
        %v1042 = vmax.f32 %v1010, 0.0
        %1043 = vst [vmem:[%s321] sm:$0xff] %v1011
        %1044 = vst [vmem:[%s321 + $0x8] sm:$0xff] %v1012
        %1045 = vst [vmem:[%s321 + $0x10] sm:$0xff] %v1013
        %1046 = vst [vmem:[%s321 + $0x18] sm:$0xff] %v1014
        %1047 = vst [vmem:[%s321 + $0x20] sm:$0xff] %v1015
        %1048 = vst [vmem:[%s321 + $0x28] sm:$0xff] %v1016
        %1049 = vst [vmem:[%s321 + $0x30] sm:$0xff] %v1017
        %1050 = vst [vmem:[%s321 + $0x38] sm:$0xff] %v1018
        %1051 = vst [vmem:[%s321 + $0x40] sm:$0xff] %v1019
        %1052 = vst [vmem:[%s321 + $0x48] sm:$0xff] %v1020
        %1053 = vst [vmem:[%s321 + $0x50] sm:$0xff] %v1021
        %1054 = vst [vmem:[%s321 + $0x58] sm:$0xff] %v1022
        %1055 = vst [vmem:[%s321 + $0x60] sm:$0xff] %v1023
        %1056 = vst [vmem:[%s321 + $0x68] sm:$0xff] %v1024
        %1057 = vst [vmem:[%s321 + $0x70] sm:$0xff] %v1025
        %1058 = vst [vmem:[%s321 + $0x78] sm:$0xff] %v1026
        %1059 = vst [vmem:[%s321 + $0x80] sm:$0xff] %v1027
        %1060 = vst [vmem:[%s321 + $0x88] sm:$0xff] %v1028
        %1061 = vst [vmem:[%s321 + $0x90] sm:$0xff] %v1029
        %1062 = vst [vmem:[%s321 + $0x98] sm:$0xff] %v1030
        %1063 = vst [vmem:[%s321 + $0xa0] sm:$0xff] %v1031
        %1064 = vst [vmem:[%s321 + $0xa8] sm:$0xff] %v1032
        %1065 = vst [vmem:[%s321 + $0xb0] sm:$0xff] %v1033
        %1066 = vst [vmem:[%s321 + $0xb8] sm:$0xff] %v1034
        %1067 = vst [vmem:[%s321 + $0xc0] sm:$0xff] %v1035
        %1068 = vst [vmem:[%s321 + $0xc8] sm:$0xff] %v1036
        %1069 = vst [vmem:[%s321 + $0xd0] sm:$0xff] %v1037
        %1070 = vst [vmem:[%s321 + $0xd8] sm:$0xff] %v1038
        %1071 = vst [vmem:[%s321 + $0xe0] sm:$0xff] %v1039
        %1072 = vst [vmem:[%s321 + $0xe8] sm:$0xff] %v1040
        %1073 = vst [vmem:[%s321 + $0xf0] sm:$0xff] %v1041
        %1074 = vst [vmem:[%s321 + $0xf8] sm:$0xff] %v1042
      $region40: #{stem_forward.2} parent=31 // pred_fallthru
        _
      %s1075 = smul.u32 32, %s21
      %p1076 = scmp.lt.s32.totalorder %s20, 0
      %s1077 = scalar_select %p1076, %s20, 0
      %p1078 = scmp.lt.s32.totalorder %s1075, 63
      %s1079 = scalar_select %p1078, %s1075, 63
      %p1080 = scmp.lt.s32.totalorder %s22, 0
      %s1081 = scalar_select %p1080, %s22, 0
      %s1082 = sadd.s32 %s1081, %s1079
      %s1083 = smul.addr %s1077, 64
      %s1084 = sadd.s32 %s1082, %s1083
      %s1085 = smul.addr %s1084, 8
      %s1086 = scalar_lea.vmem %s3, %s1085
      // Predicated region
      $region41: #{stem_forward.2} parent=31 // pred_check
        %p1087 = pneg %p150
      $region42: #{stem_forward.2} parent=31 // pred_check_branch
        %1089 = sbr.rel (%p1087) target = $region44
      $region43: #{stem_forward.2} parent=31 // pred_region
        %s1090 = smul.u32 32, %s21
      $region44: #{stem_forward.2} parent=31 // pred_fallthru
        _
    $region32: #{stem_forward.2} parent=5 // pred_fallthru
      _
    %p1091 = scmp.le.s32.totalorder 2, %s9
    // Predicated region
    $region45: #{stem_forward.2} parent=5 // pred_check
      %p1092 = pneg %p1091
    $region46: #{stem_forward.2} parent=5 // pred_check_branch
      %1094 = sbr.rel (%p1092) target = $region48
    $region47: #{stem_forward.2} parent=5 // pred_region
      %s1095 = ssub.s32 %s9, 2
      // Predicated region
      $region49: #{stem_forward.2} parent=47 // pred_check
        %p1096 = pneg %p156
      $region50: #{stem_forward.2} parent=47 // pred_check_branch
        %1098 = sbr.rel (%p1096) target = $region52
      $region51: #{stem_forward.2} parent=47 // pred_region
        %s1099 = smul.u32 32, %s25
        %p1100 = scmp.lt.s32.totalorder %s24, 0
        %s1101 = scalar_select %p1100, %s24, 0
        %p1102 = scmp.lt.s32.totalorder %s1099, 63
        %s1103 = scalar_select %p1102, %s1099, 63
        %p1104 = scmp.lt.s32.totalorder %s26, 0
        %s1105 = scalar_select %p1104, %s26, 0
        %s1106 = sadd.s32 %s1105, %s1103
        %s1107 = smul.addr %s1101, 64
        %s1108 = sadd.s32 %s1106, %s1107
        %s1109 = smul.addr %s1108, 8
        %s1110 = scalar_lea.vmem %s3, %s1109
      $region52: #{stem_forward.2} parent=47 // pred_fallthru
        _
    $region48: #{stem_forward.2} parent=5 // pred_fallthru
      _
  $region6: #{stem_forward.2} parent=0 // loop_footer
    %s13 = sadd.s32 1, %s9
  $region7: #{stem_forward.2} parent=0 // loop_footer_branch
    %8 = sbr.rel target = $region3
  $region8: #{stem_forward.2} parent=0 // loop_exit
    _

</llo_original>
